<compile_context>
chip_gen: v7x
topology: tpu7x:2x2x1
jax: 0.10.0
libtpu: 0.0.40
codegen_flags: <defaults>
</compile_context>

<pallas_src>
import functools

import jax
import jax.numpy as jnp
from jax.experimental import pallas as pl
from jax.experimental.pallas import tpu as pltpu

# ---------------- config (mirrors cfg / submodule shapes) ----------------
BATCH = 2
METRIC_DIM = 8           # metrics feature dim (textencoder input)
EMBED_DIM = 32           # events_embeds dim
LATENT_CH = 4            # cfg.latent_channels
LENGTH = 64              # cfg.length
SCALE_FACTOR = 4         # cfg.scale_factor
LATENT_LEN = LENGTH // SCALE_FACTOR
HIDDEN = 32              # unet hidden channels
OUT_CH = 1               # decoded event channels
KSIZE = 3                # unet conv1d kernel size
INIT_NOISE_SIGMA = 1.0   # scheduler.init_noise_sigma
VAE_SCALING = 0.18215    # autoencoder.config.scaling_factor
OUT_LANES = 128          # decode output padded to a full lane width


# ---------------- the single fused pipeline kernel (no grid) ----------------
def _pipeline_kernel(metrics_ref, lat0_ref, slab_a_ref, slab_b_ref, slab_d_ref,
                     o_ref, *, num_steps):
    """Whole StableDiff1d forward in one invocation.

    slab_a (LC+E+T*B+METRIC_DIM+1, LH):
        [0:LC]            conv1 band matrix  (LC, LH)
        [LC:LC+E]         context projection (E, LH)   (wctx tiled over length)
        [LC+E : +T*B]     per-step timestep embeddings, b1 already folded in
        next METRIC_DIM   w_text (padded to LH lanes, first E valid)
        last row          b_text (padded, first E valid)
    slab_b (LH+1, LC):    [0:LH] dt * conv2 band matrix ; last row dt * b2
    slab_d (LC+1, 128):   [0:LC] decode matrix / VAE_SCALING (padded lanes) ;
                          last row b_dec (padded lanes)
    """
    L, C, H, E, B = LATENT_LEN, LATENT_CH, HIDDEN, EMBED_DIM, metrics_ref.shape[0]
    LC, LH = L * C, L * H
    temb_off = LC + E
    wtext_off = temb_off + num_steps * B
    btext_off = wtext_off + METRIC_DIM

    # ---- textencoder.embed_text_with_l2norm (once) ----
    w_text = slab_a_ref[wtext_off:wtext_off + METRIC_DIM, 0:E]
    b_text = slab_a_ref[btext_off:btext_off + 1, 0:E]
    e = jnp.dot(metrics_ref[...], w_text,
                preferred_element_type=jnp.float32) + b_text
    e = e * jax.lax.rsqrt(jnp.sum(e * e, axis=-1, keepdims=True) + 1e-12)

    # ---- step-invariant cross-conditioning projection, hoisted out of the
    # denoise loop (events_embeds[:, None, :] expansion is pure layout glue) ----
    cond = jnp.dot(e, slab_a_ref[LC:LC + E, :],
                   preferred_element_type=jnp.float32)           # (B, LH)

    a1 = slab_a_ref[0:LC, :]                                     # (LC, LH)
    a2_dt = slab_b_ref[0:LH, :]                                  # (LH, LC), dt folded
    b2_dt = slab_b_ref[LH:LH + 1, :]                             # (1, LC),  dt folded

    # ---- latent init (scheduler.init_noise_sigma) ----
    x = lat0_ref[...] * INIT_NOISE_SIGMA                         # (B, LC)

    # ---- fully-unrolled denoise loop: unet (conv1d->SiLU->conv1d as two
    # dense MXU matmuls over the flattened length*channel axis) fused with the
    # Euler scheduler.step.  num_steps is static -> straight-line code, all
    # slab slices static. ----
    for t in range(num_steps):
        temb = slab_a_ref[temb_off + t * B: temb_off + (t + 1) * B, :]  # b1 folded
        h = jnp.dot(x, a1, preferred_element_type=jnp.float32) + temb + cond
        h = h * jax.nn.sigmoid(h)                                 # SiLU
        x = x - (jnp.dot(h, a2_dt, preferred_element_type=jnp.float32) + b2_dt)

    # ---- autoencoder.decode (1/VAE_SCALING folded into slab_d);
    # lane-dense (B, 128) store, valid data in the first LENGTH lanes ----
    adec = slab_d_ref[0:LC, :]
    bdec = slab_d_ref[LC:LC + 1, :]
    o_ref[...] = jnp.dot(x, adec, preferred_element_type=jnp.float32) + bdec


# ---------------- one-time weight preprocessing (outside the kernel) ---------
def _conv_band_matrix(w, length):
    """Dense matrix D with flatten(conv1d_same(x, w)) == flatten(x) @ D.

    w: (K, C_in, C_out) taps of a 'same'-padded 1D conv (pad = (K-1)//2).
    D[m*C_in + c, l*C_out + o] = w[m - l + pad, c, o] inside the band, else 0.
    """
    K, cin, cout = w.shape
    pad = (K - 1) // 2
    m = jnp.arange(length)[:, None]
    l = jnp.arange(length)[None, :]
    k = m - l + pad                                            # (L, L)
    valid = (k >= 0) & (k < K)
    w_g = w[jnp.clip(k, 0, K - 1)]                             # (L, L, cin, cout)
    band = jnp.where(valid[:, :, None, None], w_g, 0.0)
    return band.transpose(0, 2, 1, 3).reshape(length * cin, length * cout)


def _decode_matrix(w_dec, length):
    """Block-diagonal (L*C, L*S) matrix: per-position linear decode as one matmul."""
    c, s = w_dec.shape
    eye = jnp.eye(length, dtype=w_dec.dtype)
    d = eye[:, None, :, None] * w_dec[None, :, None, :]        # (L, C, L, S)
    return d.reshape(length * c, length * s)


def _timestep_embedding_table(timesteps, batch, dim, tile):
    """Sin/cos timestep embeddings, broadcast over batch and pre-tiled over length."""
    half = dim // 2
    freqs = jnp.exp(-jnp.log(10000.0) * jnp.arange(half, dtype=jnp.float32)
                    / (half - 1))
    ang = (timesteps.astype(jnp.float32) * 1000.0)[:, None] * freqs[None, :]
    emb = jnp.concatenate([jnp.sin(ang), jnp.cos(ang)], axis=-1)       # (T, dim)
    emb = jnp.broadcast_to(emb[:, None, :], (timesteps.shape[0], batch, dim))
    return jnp.tile(emb, (1, 1, tile))                                 # (T, B, tile*dim)


# ---------------- the pipeline forward (StableDiff1d.forward, is_inpaint=False)
def stable_diff_1d_forward(metrics, params, latents=None,
                           guidance_scale=1, num_inference_steps=4):
    del guidance_scale  # ==1 -> do_classifier_free_guidance is False (dead branch)
    B = metrics.shape[0]
    T = int(num_inference_steps)
    L, C, H, E = LATENT_LEN, LATENT_CH, HIDDEN, EMBED_DIM
    S = SCALE_FACTOR * OUT_CH
    dt = 1.0 / T

    # TODO(synk): diffusers retrieve_timesteps / scheduler internals are external;
    # a deterministic linear timestep schedule + Euler-style update stands in.
    timesteps = jnp.linspace(1.0, 1.0 / T, T)
    temb = _timestep_embedding_table(timesteps, B, H, L)           # (T, B, L*H)

    if latents is None:
        # randn_tensor stand-in (external in the reference)
        latents = jax.random.normal(jax.random.PRNGKey(1), (B, L, C), jnp.float32)
    lat0 = latents.reshape(B, L * C)                               # flattened NWC

    # --- one-time preprocessing: convs/decoder as dense band matmuls, biases /
    # dt / VAE scale folded in, everything packed into 3 constant slabs. ---
    a1 = _conv_band_matrix(params['w1'], L)                        # (L*C, L*H)
    a2 = _conv_band_matrix(params['w2'], L)                        # (L*H, L*C)
    adec = _decode_matrix(params['w_dec'], L)                      # (L*C, L*S)
    b1t = jnp.tile(params['b1'], (1, L))                           # (1, L*H)
    b2t = jnp.tile(params['b2'], (1, L))                           # (1, L*C)
    bdect = jnp.tile(params['b_dec'], (1, L))                      # (1, L*S)
    wctxt = jnp.tile(params['wctx'], (1, L))                       # (E, L*H)

    temb_b1 = (temb + b1t[None]).reshape(T * B, L * H)             # b1 folded in
    a2_dt = dt * a2                                                # dt folded in
    b2_dt = dt * b2t
    adec_pad = jnp.zeros((L * C, OUT_LANES), jnp.float32).at[:, :L * S].set(
        adec / VAE_SCALING)                                        # 1/VAE folded in
    bdec_pad = jnp.zeros((1, OUT_LANES), jnp.float32).at[:, :L * S].set(bdect)
    wtext_pad = jnp.zeros((METRIC_DIM, L * H), jnp.float32).at[:, :E].set(
        params['w_text'])
    btext_pad = jnp.zeros((1, L * H), jnp.float32).at[:, :E].set(params['b_text'])

    slab_a = jnp.concatenate([a1, wctxt, temb_b1, wtext_pad, btext_pad], axis=0)
    slab_b = jnp.concatenate([a2_dt, b2_dt], axis=0)               # (L*H+1, L*C)
    slab_d = jnp.concatenate([adec_pad, bdec_pad], axis=0)         # (L*C+1, 128)

    vmem = pl.BlockSpec(memory_space=pltpu.MemorySpace.VMEM)
    out = pl.pallas_call(
        functools.partial(_pipeline_kernel, num_steps=T),
        out_shape=jax.ShapeDtypeStruct((B, OUT_LANES), jnp.float32),
        in_specs=[vmem] * 5,
        out_specs=vmem,
    )(metrics, lat0, slab_a, slab_b, slab_d)

    # OUT_CH == 1: the first LENGTH lanes of each row are already NCW order;
    # the slice/reshape is wrapper-side metadata/layout glue, outside the kernel.
    decoded = out[:, :LENGTH].reshape(B, OUT_CH, LENGTH)
    return (decoded,)


# ---------------- deterministic parameter init ----------------
def init_params(key):
    ks = jax.random.split(key, 5)
    s = lambda k, shape, scale: scale * jax.random.normal(k, shape, jnp.float32)
    return dict(
        w_text=s(ks[0], (METRIC_DIM, EMBED_DIM), 0.2),
        b_text=jnp.zeros((1, EMBED_DIM), jnp.float32),
        w1=s(ks[1], (KSIZE, LATENT_CH, HIDDEN), 0.3),
        b1=jnp.zeros((1, HIDDEN), jnp.float32),
        wctx=s(ks[2], (EMBED_DIM, HIDDEN), 0.2),
        w2=s(ks[3], (KSIZE, HIDDEN, LATENT_CH), 0.1),
        b2=jnp.zeros((1, LATENT_CH), jnp.float32),
        w_dec=s(ks[4], (LATENT_CH, SCALE_FACTOR * OUT_CH), 0.3),
        b_dec=jnp.zeros((1, SCALE_FACTOR * OUT_CH), jnp.float32),
    )


if __name__ == "__main__":
    key = jax.random.PRNGKey(0)
    pkey, mkey = jax.random.split(key)
    params = init_params(pkey)
    metrics = jax.random.normal(mkey, (BATCH, METRIC_DIM), jnp.float32)

    fwd = jax.jit(functools.partial(stable_diff_1d_forward,
                                    num_inference_steps=4))
    (decoded,) = fwd(metrics, params)
    jax.block_until_ready(decoded)

    assert decoded.shape == (BATCH, OUT_CH, LENGTH), decoded.shape
    assert decoded.dtype == jnp.float32
    assert bool(jnp.all(jnp.isfinite(decoded)))
    print("KERNEL_OK")
</pallas_src>

<mosaic_0001>
module attributes {stable_mosaic.version = 11 : i64} {
  func.func @_pipeline_kernel(%arg0: memref<2x8xf32, #tpu.memory_space<vmem>>, %arg1: memref<2x64xf32, #tpu.memory_space<vmem>>, %arg2: memref<113x512xf32, #tpu.memory_space<vmem>>, %arg3: memref<513x64xf32, #tpu.memory_space<vmem>>, %arg4: memref<65x128xf32, #tpu.memory_space<vmem>>, %arg5: memref<2x128xf32, #tpu.memory_space<vmem>>) attributes {dimension_semantics = [], scalar_prefetch = 0 : i64, scratch_operands = 0 : i64, tpu.core_type = #tpu.core_type<tc>} {
    %c104 = arith.constant 104 : index
    %c0 = arith.constant 0 : index
    %0 = vector.load %arg2[%c104, %c0] : memref<113x512xf32, #tpu.memory_space<vmem>>, vector<8x32xf32>
    %c112 = arith.constant 112 : index
    %c0_0 = arith.constant 0 : index
    %1 = vector.load %arg2[%c112, %c0_0] : memref<113x512xf32, #tpu.memory_space<vmem>>, vector<1x32xf32>
    %c0_1 = arith.constant 0 : index
    %c0_2 = arith.constant 0 : index
    %2 = vector.load %arg0[%c0_1, %c0_2] : memref<2x8xf32, #tpu.memory_space<vmem>>, vector<2x8xf32>
    %cst = arith.constant dense<0.000000e+00> : vector<2x32xf32>
    %3 = tpu.matmul %2, %0, %cst {dimension_numbers = #tpu.dot_dimension_numbers<[1], [0], [0], [1], [0, 0, 1, 1], [], []>} : vector<2x8xf32>, vector<8x32xf32>, vector<2x32xf32> -> vector<2x32xf32>
    %4 = vector.broadcast %1 : vector<1x32xf32> to vector<2x32xf32>
    %5 = arith.addf %3, %4 : vector<2x32xf32>
    %6 = arith.mulf %5, %5 : vector<2x32xf32>
    %cst_3 = arith.constant dense<0.000000e+00> : vector<2xf32>
    %7 = vector.multi_reduction <add>, %6, %cst_3 [1] : vector<2x32xf32> to vector<2xf32>
    %8 = vector.shape_cast %7 : vector<2xf32> to vector<2x1xf32>
    %cst_4 = arith.constant 9.99999996E-13 : f32
    %9 = vector.broadcast %cst_4 : f32 to vector<2x1xf32>
    %10 = arith.addf %8, %9 : vector<2x1xf32>
    %11 = math.rsqrt %10 : vector<2x1xf32>
    %12 = vector.broadcast %11 : vector<2x1xf32> to vector<2x32xf32>
    %13 = arith.mulf %5, %12 : vector<2x32xf32>
    %c64 = arith.constant 64 : index
    %c0_5 = arith.constant 0 : index
    %14 = vector.load %arg2[%c64, %c0_5] : memref<113x512xf32, #tpu.memory_space<vmem>>, vector<32x512xf32>
    %cst_6 = arith.constant dense<0.000000e+00> : vector<2x512xf32>
    %15 = tpu.matmul %13, %14, %cst_6 {dimension_numbers = #tpu.dot_dimension_numbers<[1], [0], [0], [1], [0, 0, 1, 1], [], []>} : vector<2x32xf32>, vector<32x512xf32>, vector<2x512xf32> -> vector<2x512xf32>
    %c0_7 = arith.constant 0 : index
    %c0_8 = arith.constant 0 : index
    %16 = vector.load %arg2[%c0_7, %c0_8] : memref<113x512xf32, #tpu.memory_space<vmem>>, vector<64x512xf32>
    %c0_9 = arith.constant 0 : index
    %c0_10 = arith.constant 0 : index
    %17 = vector.load %arg3[%c0_9, %c0_10] : memref<513x64xf32, #tpu.memory_space<vmem>>, vector<512x64xf32>
    %c512 = arith.constant 512 : index
    %c0_11 = arith.constant 0 : index
    %18 = vector.load %arg3[%c512, %c0_11] : memref<513x64xf32, #tpu.memory_space<vmem>>, vector<1x64xf32>
    %c0_12 = arith.constant 0 : index
    %c0_13 = arith.constant 0 : index
    %19 = vector.load %arg1[%c0_12, %c0_13] : memref<2x64xf32, #tpu.memory_space<vmem>>, vector<2x64xf32>
    %cst_14 = arith.constant 1.000000e+00 : f32
    %20 = vector.broadcast %cst_14 : f32 to vector<2x64xf32>
    %21 = arith.mulf %19, %20 : vector<2x64xf32>
    %c96 = arith.constant 96 : index
    %c0_15 = arith.constant 0 : index
    %22 = vector.load %arg2[%c96, %c0_15] : memref<113x512xf32, #tpu.memory_space<vmem>>, vector<2x512xf32>
    %cst_16 = arith.constant dense<0.000000e+00> : vector<2x512xf32>
    %23 = tpu.matmul %21, %16, %cst_16 {dimension_numbers = #tpu.dot_dimension_numbers<[1], [0], [0], [1], [0, 0, 1, 1], [], []>} : vector<2x64xf32>, vector<64x512xf32>, vector<2x512xf32> -> vector<2x512xf32>
    %24 = arith.addf %23, %22 : vector<2x512xf32>
    %25 = arith.addf %24, %15 : vector<2x512xf32>
    %26 = arith.negf %25 : vector<2x512xf32>
    %27 = math.exp %26 : vector<2x512xf32>
    %cst_17 = arith.constant 1.000000e+00 : f32
    %28 = vector.broadcast %cst_17 : f32 to vector<2x512xf32>
    %29 = arith.addf %28, %27 : vector<2x512xf32>
    %30 = arith.divf %28, %29 : vector<2x512xf32>
    %31 = arith.mulf %25, %30 : vector<2x512xf32>
    %cst_18 = arith.constant dense<0.000000e+00> : vector<2x64xf32>
    %32 = tpu.matmul %31, %17, %cst_18 {dimension_numbers = #tpu.dot_dimension_numbers<[1], [0], [0], [1], [0, 0, 1, 1], [], []>} : vector<2x512xf32>, vector<512x64xf32>, vector<2x64xf32> -> vector<2x64xf32>
    %33 = vector.broadcast %18 : vector<1x64xf32> to vector<2x64xf32>
    %34 = arith.addf %32, %33 : vector<2x64xf32>
    %35 = arith.subf %21, %34 : vector<2x64xf32>
    %c98 = arith.constant 98 : index
    %c0_19 = arith.constant 0 : index
    %36 = vector.load %arg2[%c98, %c0_19] : memref<113x512xf32, #tpu.memory_space<vmem>>, vector<2x512xf32>
    %cst_20 = arith.constant dense<0.000000e+00> : vector<2x512xf32>
    %37 = tpu.matmul %35, %16, %cst_20 {dimension_numbers = #tpu.dot_dimension_numbers<[1], [0], [0], [1], [0, 0, 1, 1], [], []>} : vector<2x64xf32>, vector<64x512xf32>, vector<2x512xf32> -> vector<2x512xf32>
    %38 = arith.addf %37, %36 : vector<2x512xf32>
    %39 = arith.addf %38, %15 : vector<2x512xf32>
    %40 = arith.negf %39 : vector<2x512xf32>
    %41 = math.exp %40 : vector<2x512xf32>
    %cst_21 = arith.constant 1.000000e+00 : f32
    %42 = vector.broadcast %cst_21 : f32 to vector<2x512xf32>
    %43 = arith.addf %42, %41 : vector<2x512xf32>
    %44 = arith.divf %42, %43 : vector<2x512xf32>
    %45 = arith.mulf %39, %44 : vector<2x512xf32>
    %cst_22 = arith.constant dense<0.000000e+00> : vector<2x64xf32>
    %46 = tpu.matmul %45, %17, %cst_22 {dimension_numbers = #tpu.dot_dimension_numbers<[1], [0], [0], [1], [0, 0, 1, 1], [], []>} : vector<2x512xf32>, vector<512x64xf32>, vector<2x64xf32> -> vector<2x64xf32>
    %47 = vector.broadcast %18 : vector<1x64xf32> to vector<2x64xf32>
    %48 = arith.addf %46, %47 : vector<2x64xf32>
    %49 = arith.subf %35, %48 : vector<2x64xf32>
    %c100 = arith.constant 100 : index
    %c0_23 = arith.constant 0 : index
    %50 = vector.load %arg2[%c100, %c0_23] : memref<113x512xf32, #tpu.memory_space<vmem>>, vector<2x512xf32>
    %cst_24 = arith.constant dense<0.000000e+00> : vector<2x512xf32>
    %51 = tpu.matmul %49, %16, %cst_24 {dimension_numbers = #tpu.dot_dimension_numbers<[1], [0], [0], [1], [0, 0, 1, 1], [], []>} : vector<2x64xf32>, vector<64x512xf32>, vector<2x512xf32> -> vector<2x512xf32>
    %52 = arith.addf %51, %50 : vector<2x512xf32>
    %53 = arith.addf %52, %15 : vector<2x512xf32>
    %54 = arith.negf %53 : vector<2x512xf32>
    %55 = math.exp %54 : vector<2x512xf32>
    %cst_25 = arith.constant 1.000000e+00 : f32
    %56 = vector.broadcast %cst_25 : f32 to vector<2x512xf32>
    %57 = arith.addf %56, %55 : vector<2x512xf32>
    %58 = arith.divf %56, %57 : vector<2x512xf32>
    %59 = arith.mulf %53, %58 : vector<2x512xf32>
    %cst_26 = arith.constant dense<0.000000e+00> : vector<2x64xf32>
    %60 = tpu.matmul %59, %17, %cst_26 {dimension_numbers = #tpu.dot_dimension_numbers<[1], [0], [0], [1], [0, 0, 1, 1], [], []>} : vector<2x512xf32>, vector<512x64xf32>, vector<2x64xf32> -> vector<2x64xf32>
    %61 = vector.broadcast %18 : vector<1x64xf32> to vector<2x64xf32>
    %62 = arith.addf %60, %61 : vector<2x64xf32>
    %63 = arith.subf %49, %62 : vector<2x64xf32>
    %c102 = arith.constant 102 : index
    %c0_27 = arith.constant 0 : index
    %64 = vector.load %arg2[%c102, %c0_27] : memref<113x512xf32, #tpu.memory_space<vmem>>, vector<2x512xf32>
    %cst_28 = arith.constant dense<0.000000e+00> : vector<2x512xf32>
    %65 = tpu.matmul %63, %16, %cst_28 {dimension_numbers = #tpu.dot_dimension_numbers<[1], [0], [0], [1], [0, 0, 1, 1], [], []>} : vector<2x64xf32>, vector<64x512xf32>, vector<2x512xf32> -> vector<2x512xf32>
    %66 = arith.addf %65, %64 : vector<2x512xf32>
    %67 = arith.addf %66, %15 : vector<2x512xf32>
    %68 = arith.negf %67 : vector<2x512xf32>
    %69 = math.exp %68 : vector<2x512xf32>
    %cst_29 = arith.constant 1.000000e+00 : f32
    %70 = vector.broadcast %cst_29 : f32 to vector<2x512xf32>
    %71 = arith.addf %70, %69 : vector<2x512xf32>
    %72 = arith.divf %70, %71 : vector<2x512xf32>
    %73 = arith.mulf %67, %72 : vector<2x512xf32>
    %cst_30 = arith.constant dense<0.000000e+00> : vector<2x64xf32>
    %74 = tpu.matmul %73, %17, %cst_30 {dimension_numbers = #tpu.dot_dimension_numbers<[1], [0], [0], [1], [0, 0, 1, 1], [], []>} : vector<2x512xf32>, vector<512x64xf32>, vector<2x64xf32> -> vector<2x64xf32>
    %75 = vector.broadcast %18 : vector<1x64xf32> to vector<2x64xf32>
    %76 = arith.addf %74, %75 : vector<2x64xf32>
    %77 = arith.subf %63, %76 : vector<2x64xf32>
    %c0_31 = arith.constant 0 : index
    %c0_32 = arith.constant 0 : index
    %78 = vector.load %arg4[%c0_31, %c0_32] : memref<65x128xf32, #tpu.memory_space<vmem>>, vector<64x128xf32>
    %c64_33 = arith.constant 64 : index
    %c0_34 = arith.constant 0 : index
    %79 = vector.load %arg4[%c64_33, %c0_34] : memref<65x128xf32, #tpu.memory_space<vmem>>, vector<1x128xf32>
    %cst_35 = arith.constant dense<0.000000e+00> : vector<2x128xf32>
    %80 = tpu.matmul %77, %78, %cst_35 {dimension_numbers = #tpu.dot_dimension_numbers<[1], [0], [0], [1], [0, 0, 1, 1], [], []>} : vector<2x64xf32>, vector<64x128xf32>, vector<2x128xf32> -> vector<2x128xf32>
    %81 = vector.broadcast %79 : vector<1x128xf32> to vector<2x128xf32>
    %82 = arith.addf %80, %81 : vector<2x128xf32>
    %c0_36 = arith.constant 0 : index
    %c0_37 = arith.constant 0 : index
    %83 = vector.load %arg5[%c0_36, %c0_37] : memref<2x128xf32, #tpu.memory_space<vmem>>, vector<2x128xf32>
    tpu.vector_store %arg5[%c0_36, %c0_37], %82 {strides = array<i32>} : memref<2x128xf32, #tpu.memory_space<vmem>>, vector<2x128xf32>,
    return
  }
}

</mosaic_0001>

<llo_original>
// kernel: tile.48
$region0: #{tile.48}
  %s0 = inlined_call_operand.vmem [shape: f32[32,16,32], index: 0, kind: input, shape index: {}]
  %s1 = inlined_call_operand.vmem [shape: f32[32,512], index: 1, kind: output, shape index: {}]
  %v2 = vld [vmem:[%s0] ss:$4 sm:$0xff]
  %vm3 = vcmask 261120
  %4 = vst.msk [vmem:[%s1] ss:$8 sm:$0xf] %vm3, %v2
  %s5 = scalar_lea.vmem %s1, 4294967265
  %6 = vst.msk [vmem:[%s5] ss:$8 sm:$0xf0] %vm3, %v2
  %s7 = scalar_lea.vmem %s0, 32
  %v8 = vld [vmem:[%s7] ss:$4 sm:$0xff]
  %vm9 = vcmask 261120
  %s10 = scalar_lea.vmem %s1, 2
  %11 = vst.msk [vmem:[%s10] ss:$8 sm:$0xf] %vm9, %v8
  %s12 = scalar_lea.vmem %s1, 4294967267
  %13 = vst.msk [vmem:[%s12] ss:$8 sm:$0xf0] %vm9, %v8
  %s14 = scalar_lea.vmem %s0, 64
  %v15 = vld [vmem:[%s14] ss:$4 sm:$0xff]
  %vm16 = vcmask 261120
  %s17 = scalar_lea.vmem %s1, 4
  %18 = vst.msk [vmem:[%s17] ss:$8 sm:$0xf] %vm16, %v15
  %s19 = scalar_lea.vmem %s1, 4294967269
  %20 = vst.msk [vmem:[%s19] ss:$8 sm:$0xf0] %vm16, %v15
  %s21 = scalar_lea.vmem %s0, 96
  %v22 = vld [vmem:[%s21] ss:$4 sm:$0xff]
  %vm23 = vcmask 261120
  %s24 = scalar_lea.vmem %s1, 6
  %25 = vst.msk [vmem:[%s24] ss:$8 sm:$0xf] %vm23, %v22
  %s26 = scalar_lea.vmem %s1, 4294967271
  %27 = vst.msk [vmem:[%s26] ss:$8 sm:$0xf0] %vm23, %v22
  %s28 = scalar_lea.vmem %s0, 128
  %v29 = vld [vmem:[%s28] ss:$4 sm:$0xff]
  %vm30 = vcmask 261120
  %s31 = scalar_lea.vmem %s1, 32
  %32 = vst.msk [vmem:[%s31] ss:$8 sm:$0xf] %vm30, %v29
  %s33 = scalar_lea.vmem %s1, 1
  %34 = vst.msk [vmem:[%s33] ss:$8 sm:$0xf0] %vm30, %v29
  %s35 = scalar_lea.vmem %s0, 160
  %v36 = vld [vmem:[%s35] ss:$4 sm:$0xff]
  %vm37 = vcmask 261120
  %s38 = scalar_lea.vmem %s1, 34
  %39 = vst.msk [vmem:[%s38] ss:$8 sm:$0xf] %vm37, %v36
  %s40 = scalar_lea.vmem %s1, 3
  %41 = vst.msk [vmem:[%s40] ss:$8 sm:$0xf0] %vm37, %v36
  %s42 = scalar_lea.vmem %s0, 192
  %v43 = vld [vmem:[%s42] ss:$4 sm:$0xff]
  %vm44 = vcmask 261120
  %s45 = scalar_lea.vmem %s1, 36
  %46 = vst.msk [vmem:[%s45] ss:$8 sm:$0xf] %vm44, %v43
  %s47 = scalar_lea.vmem %s1, 5
  %48 = vst.msk [vmem:[%s47] ss:$8 sm:$0xf0] %vm44, %v43
  %s49 = scalar_lea.vmem %s0, 224
  %v50 = vld [vmem:[%s49] ss:$4 sm:$0xff]
  %vm51 = vcmask 261120
  %s52 = scalar_lea.vmem %s1, 38
  %53 = vst.msk [vmem:[%s52] ss:$8 sm:$0xf] %vm51, %v50
  %s54 = scalar_lea.vmem %s1, 7
  %55 = vst.msk [vmem:[%s54] ss:$8 sm:$0xf0] %vm51, %v50
  %s56 = scalar_lea.vmem %s0, 256
  %v57 = vld [vmem:[%s56] ss:$4 sm:$0xff]
  %vm58 = vcmask 261120
  %s59 = scalar_lea.vmem %s1, 64
  %60 = vst.msk [vmem:[%s59] ss:$8 sm:$0xf] %vm58, %v57
  %s61 = scalar_lea.vmem %s1, 33
  %62 = vst.msk [vmem:[%s61] ss:$8 sm:$0xf0] %vm58, %v57
  %s63 = scalar_lea.vmem %s0, 288
  %v64 = vld [vmem:[%s63] ss:$4 sm:$0xff]
  %vm65 = vcmask 261120
  %s66 = scalar_lea.vmem %s1, 66
  %67 = vst.msk [vmem:[%s66] ss:$8 sm:$0xf] %vm65, %v64
  %s68 = scalar_lea.vmem %s1, 35
  %69 = vst.msk [vmem:[%s68] ss:$8 sm:$0xf0] %vm65, %v64
  %s70 = scalar_lea.vmem %s0, 320
  %v71 = vld [vmem:[%s70] ss:$4 sm:$0xff]
  %vm72 = vcmask 261120
  %s73 = scalar_lea.vmem %s1, 68
  %74 = vst.msk [vmem:[%s73] ss:$8 sm:$0xf] %vm72, %v71
  %s75 = scalar_lea.vmem %s1, 37
  %76 = vst.msk [vmem:[%s75] ss:$8 sm:$0xf0] %vm72, %v71
  %s77 = scalar_lea.vmem %s0, 352
  %v78 = vld [vmem:[%s77] ss:$4 sm:$0xff]
  %vm79 = vcmask 261120
  %s80 = scalar_lea.vmem %s1, 70
  %81 = vst.msk [vmem:[%s80] ss:$8 sm:$0xf] %vm79, %v78
  %s82 = scalar_lea.vmem %s1, 39
  %83 = vst.msk [vmem:[%s82] ss:$8 sm:$0xf0] %vm79, %v78
  %s84 = scalar_lea.vmem %s0, 384
  %v85 = vld [vmem:[%s84] ss:$4 sm:$0xff]
  %vm86 = vcmask 261120
  %s87 = scalar_lea.vmem %s1, 96
  %88 = vst.msk [vmem:[%s87] ss:$8 sm:$0xf] %vm86, %v85
  %s89 = scalar_lea.vmem %s1, 65
  %90 = vst.msk [vmem:[%s89] ss:$8 sm:$0xf0] %vm86, %v85
  %s91 = scalar_lea.vmem %s0, 416
  %v92 = vld [vmem:[%s91] ss:$4 sm:$0xff]
  %vm93 = vcmask 261120
  %s94 = scalar_lea.vmem %s1, 98
  %95 = vst.msk [vmem:[%s94] ss:$8 sm:$0xf] %vm93, %v92
  %s96 = scalar_lea.vmem %s1, 67
  %97 = vst.msk [vmem:[%s96] ss:$8 sm:$0xf0] %vm93, %v92
  %s98 = scalar_lea.vmem %s0, 448
  %v99 = vld [vmem:[%s98] ss:$4 sm:$0xff]
  %vm100 = vcmask 261120
  %s101 = scalar_lea.vmem %s1, 100
  %102 = vst.msk [vmem:[%s101] ss:$8 sm:$0xf] %vm100, %v99
  %s103 = scalar_lea.vmem %s1, 69
  %104 = vst.msk [vmem:[%s103] ss:$8 sm:$0xf0] %vm100, %v99
  %s105 = scalar_lea.vmem %s0, 480
  %v106 = vld [vmem:[%s105] ss:$4 sm:$0xff]
  %vm107 = vcmask 261120
  %s108 = scalar_lea.vmem %s1, 102
  %109 = vst.msk [vmem:[%s108] ss:$8 sm:$0xf] %vm107, %v106
  %s110 = scalar_lea.vmem %s1, 71
  %111 = vst.msk [vmem:[%s110] ss:$8 sm:$0xf0] %vm107, %v106
  %s112 = scalar_lea.vmem %s0, 3
  %s113 = smov 3
  %v114 = vld [vmem:[%s112] ss:$16 sm:%s113]
  %s115 = scalar_lea.vmem %s0, 3
  %s116 = smov 12
  %v117 = vld [vmem:[%s115] ss:$16 sm:%s116]
  %vm118 = vcmask 1043458
  %v119 = vsel %vm118, %v117, %v114
  %s120 = scalar_lea.vmem %s0, 3
  %s121 = smov 48
  %v122 = vld [vmem:[%s120] ss:$16 sm:%s121]
  %vm123 = vcmask 1045508
  %v124 = vsel %vm123, %v122, %v119
  %s125 = scalar_lea.vmem %s0, 3
  %s126 = smov 192
  %v127 = vld [vmem:[%s125] ss:$16 sm:%s126]
  %vm128 = vcmask 1047558
  %v129 = vsel %vm128, %v127, %v124
  %130 = vrot.lane.b32.xlu0 %v129, 96
  %v131 = vpop.permute.xlu0 %130
  %vm132 = vcmask 1048320
  %133 = vst.msk [vmem:[%s1] sm:$0xff] %vm132, %v131
  %s134 = scalar_lea.vmem %s0, 131
  %s135 = smov 3
  %v136 = vld [vmem:[%s134] ss:$16 sm:%s135]
  %s137 = scalar_lea.vmem %s0, 131
  %s138 = smov 12
  %v139 = vld [vmem:[%s137] ss:$16 sm:%s138]
  %vm140 = vcmask 1043458
  %v141 = vsel %vm140, %v139, %v136
  %s142 = scalar_lea.vmem %s0, 131
  %s143 = smov 48
  %v144 = vld [vmem:[%s142] ss:$16 sm:%s143]
  %vm145 = vcmask 1045508
  %v146 = vsel %vm145, %v144, %v141
  %s147 = scalar_lea.vmem %s0, 131
  %s148 = smov 192
  %v149 = vld [vmem:[%s147] ss:$16 sm:%s148]
  %vm150 = vcmask 1047558
  %v151 = vsel %vm150, %v149, %v146
  %152 = vrot.lane.b32.xlu0 %v151, 96
  %v153 = vpop.permute.xlu0 %152
  %vm154 = vcmask 1048320
  %s155 = scalar_lea.vmem %s1, 32
  %156 = vst.msk [vmem:[%s155] sm:$0xff] %vm154, %v153
  %s157 = scalar_lea.vmem %s0, 259
  %s158 = smov 3
  %v159 = vld [vmem:[%s157] ss:$16 sm:%s158]
  %s160 = scalar_lea.vmem %s0, 259
  %s161 = smov 12
  %v162 = vld [vmem:[%s160] ss:$16 sm:%s161]
  %vm163 = vcmask 1043458
  %v164 = vsel %vm163, %v162, %v159
  %s165 = scalar_lea.vmem %s0, 259
  %s166 = smov 48
  %v167 = vld [vmem:[%s165] ss:$16 sm:%s166]
  %vm168 = vcmask 1045508
  %v169 = vsel %vm168, %v167, %v164
  %s170 = scalar_lea.vmem %s0, 259
  %s171 = smov 192
  %v172 = vld [vmem:[%s170] ss:$16 sm:%s171]
  %vm173 = vcmask 1047558
  %v174 = vsel %vm173, %v172, %v169
  %175 = vrot.lane.b32.xlu0 %v174, 96
  %v176 = vpop.permute.xlu0 %175
  %vm177 = vcmask 1048320
  %s178 = scalar_lea.vmem %s1, 64
  %179 = vst.msk [vmem:[%s178] sm:$0xff] %vm177, %v176
  %s180 = scalar_lea.vmem %s0, 387
  %s181 = smov 3
  %v182 = vld [vmem:[%s180] ss:$16 sm:%s181]
  %s183 = scalar_lea.vmem %s0, 387
  %s184 = smov 12
  %v185 = vld [vmem:[%s183] ss:$16 sm:%s184]
  %vm186 = vcmask 1043458
  %v187 = vsel %vm186, %v185, %v182
  %s188 = scalar_lea.vmem %s0, 387
  %s189 = smov 48
  %v190 = vld [vmem:[%s188] ss:$16 sm:%s189]
  %vm191 = vcmask 1045508
  %v192 = vsel %vm191, %v190, %v187
  %s193 = scalar_lea.vmem %s0, 387
  %s194 = smov 192
  %v195 = vld [vmem:[%s193] ss:$16 sm:%s194]
  %vm196 = vcmask 1047558
  %v197 = vsel %vm196, %v195, %v192
  %198 = vrot.lane.b32.xlu0 %v197, 96
  %v199 = vpop.permute.xlu0 %198
  %vm200 = vcmask 1048320
  %s201 = scalar_lea.vmem %s1, 96
  %202 = vst.msk [vmem:[%s201] sm:$0xff] %vm200, %v199
  %s203 = scalar_lea.vmem %s0, 7
  %s204 = smov 3
  %v205 = vld [vmem:[%s203] ss:$16 sm:%s204]
  %s206 = scalar_lea.vmem %s0, 7
  %s207 = smov 12
  %v208 = vld [vmem:[%s206] ss:$16 sm:%s207]
  %vm209 = vcmask 1043458
  %v210 = vsel %vm209, %v208, %v205
  %s211 = scalar_lea.vmem %s0, 7
  %s212 = smov 48
  %v213 = vld [vmem:[%s211] ss:$16 sm:%s212]
  %vm214 = vcmask 1045508
  %v215 = vsel %vm214, %v213, %v210
  %s216 = scalar_lea.vmem %s0, 7
  %s217 = smov 192
  %v218 = vld [vmem:[%s216] ss:$16 sm:%s217]
  %vm219 = vcmask 1047558
  %v220 = vsel %vm219, %v218, %v215
  %221 = vrot.lane.b32.xlu0 %v220, 96
  %v222 = vpop.permute.xlu0 %221
  %vm223 = vcmask 1048320
  %s224 = scalar_lea.vmem %s1, 8
  %225 = vst.msk [vmem:[%s224] sm:$0xff] %vm223, %v222
  %s226 = scalar_lea.vmem %s0, 135
  %s227 = smov 3
  %v228 = vld [vmem:[%s226] ss:$16 sm:%s227]
  %s229 = scalar_lea.vmem %s0, 135
  %s230 = smov 12
  %v231 = vld [vmem:[%s229] ss:$16 sm:%s230]
  %vm232 = vcmask 1043458
  %v233 = vsel %vm232, %v231, %v228
  %s234 = scalar_lea.vmem %s0, 135
  %s235 = smov 48
  %v236 = vld [vmem:[%s234] ss:$16 sm:%s235]
  %vm237 = vcmask 1045508
  %v238 = vsel %vm237, %v236, %v233
  %s239 = scalar_lea.vmem %s0, 135
  %s240 = smov 192
  %v241 = vld [vmem:[%s239] ss:$16 sm:%s240]
  %vm242 = vcmask 1047558
  %v243 = vsel %vm242, %v241, %v238
  %244 = vrot.lane.b32.xlu0 %v243, 96
  %v245 = vpop.permute.xlu0 %244
  %vm246 = vcmask 1048320
  %s247 = scalar_lea.vmem %s1, 40
  %248 = vst.msk [vmem:[%s247] sm:$0xff] %vm246, %v245
  %s249 = scalar_lea.vmem %s0, 263
  %s250 = smov 3
  %v251 = vld [vmem:[%s249] ss:$16 sm:%s250]
  %s252 = scalar_lea.vmem %s0, 263
  %s253 = smov 12
  %v254 = vld [vmem:[%s252] ss:$16 sm:%s253]
  %vm255 = vcmask 1043458
  %v256 = vsel %vm255, %v254, %v251
  %s257 = scalar_lea.vmem %s0, 263
  %s258 = smov 48
  %v259 = vld [vmem:[%s257] ss:$16 sm:%s258]
  %vm260 = vcmask 1045508
  %v261 = vsel %vm260, %v259, %v256
  %s262 = scalar_lea.vmem %s0, 263
  %s263 = smov 192
  %v264 = vld [vmem:[%s262] ss:$16 sm:%s263]
  %vm265 = vcmask 1047558
  %v266 = vsel %vm265, %v264, %v261
  %267 = vrot.lane.b32.xlu0 %v266, 96
  %v268 = vpop.permute.xlu0 %267
  %vm269 = vcmask 1048320
  %s270 = scalar_lea.vmem %s1, 72
  %271 = vst.msk [vmem:[%s270] sm:$0xff] %vm269, %v268
  %s272 = scalar_lea.vmem %s0, 391
  %s273 = smov 3
  %v274 = vld [vmem:[%s272] ss:$16 sm:%s273]
  %s275 = scalar_lea.vmem %s0, 391
  %s276 = smov 12
  %v277 = vld [vmem:[%s275] ss:$16 sm:%s276]
  %vm278 = vcmask 1043458
  %v279 = vsel %vm278, %v277, %v274
  %s280 = scalar_lea.vmem %s0, 391
  %s281 = smov 48
  %v282 = vld [vmem:[%s280] ss:$16 sm:%s281]
  %vm283 = vcmask 1045508
  %v284 = vsel %vm283, %v282, %v279
  %s285 = scalar_lea.vmem %s0, 391
  %s286 = smov 192
  %v287 = vld [vmem:[%s285] ss:$16 sm:%s286]
  %vm288 = vcmask 1047558
  %v289 = vsel %vm288, %v287, %v284
  %290 = vrot.lane.b32.xlu0 %v289, 96
  %v291 = vpop.permute.xlu0 %290
  %vm292 = vcmask 1048320
  %s293 = scalar_lea.vmem %s1, 104
  %294 = vst.msk [vmem:[%s293] sm:$0xff] %vm292, %v291
  %s295 = scalar_lea.vmem %s0, 11
  %s296 = smov 3
  %v297 = vld [vmem:[%s295] ss:$16 sm:%s296]
  %s298 = scalar_lea.vmem %s0, 11
  %s299 = smov 12
  %v300 = vld [vmem:[%s298] ss:$16 sm:%s299]
  %vm301 = vcmask 1043458
  %v302 = vsel %vm301, %v300, %v297
  %s303 = scalar_lea.vmem %s0, 11
  %s304 = smov 48
  %v305 = vld [vmem:[%s303] ss:$16 sm:%s304]
  %vm306 = vcmask 1045508
  %v307 = vsel %vm306, %v305, %v302
  %s308 = scalar_lea.vmem %s0, 11
  %s309 = smov 192
  %v310 = vld [vmem:[%s308] ss:$16 sm:%s309]
  %vm311 = vcmask 1047558
  %v312 = vsel %vm311, %v310, %v307
  %313 = vrot.lane.b32.xlu0 %v312, 96
  %v314 = vpop.permute.xlu0 %313
  %vm315 = vcmask 1048320
  %s316 = scalar_lea.vmem %s1, 16
  %317 = vst.msk [vmem:[%s316] sm:$0xff] %vm315, %v314
  %s318 = scalar_lea.vmem %s0, 139
  %s319 = smov 3
  %v320 = vld [vmem:[%s318] ss:$16 sm:%s319]
  %s321 = scalar_lea.vmem %s0, 139
  %s322 = smov 12
  %v323 = vld [vmem:[%s321] ss:$16 sm:%s322]
  %vm324 = vcmask 1043458
  %v325 = vsel %vm324, %v323, %v320
  %s326 = scalar_lea.vmem %s0, 139
  %s327 = smov 48
  %v328 = vld [vmem:[%s326] ss:$16 sm:%s327]
  %vm329 = vcmask 1045508
  %v330 = vsel %vm329, %v328, %v325
  %s331 = scalar_lea.vmem %s0, 139
  %s332 = smov 192
  %v333 = vld [vmem:[%s331] ss:$16 sm:%s332]
  %vm334 = vcmask 1047558
  %v335 = vsel %vm334, %v333, %v330
  %336 = vrot.lane.b32.xlu0 %v335, 96
  %v337 = vpop.permute.xlu0 %336
  %vm338 = vcmask 1048320
  %s339 = scalar_lea.vmem %s1, 48
  %340 = vst.msk [vmem:[%s339] sm:$0xff] %vm338, %v337
  %s341 = scalar_lea.vmem %s0, 267
  %s342 = smov 3
  %v343 = vld [vmem:[%s341] ss:$16 sm:%s342]
  %s344 = scalar_lea.vmem %s0, 267
  %s345 = smov 12
  %v346 = vld [vmem:[%s344] ss:$16 sm:%s345]
  %vm347 = vcmask 1043458
  %v348 = vsel %vm347, %v346, %v343
  %s349 = scalar_lea.vmem %s0, 267
  %s350 = smov 48
  %v351 = vld [vmem:[%s349] ss:$16 sm:%s350]
  %vm352 = vcmask 1045508
  %v353 = vsel %vm352, %v351, %v348
  %s354 = scalar_lea.vmem %s0, 267
  %s355 = smov 192
  %v356 = vld [vmem:[%s354] ss:$16 sm:%s355]
  %vm357 = vcmask 1047558
  %v358 = vsel %vm357, %v356, %v353
  %359 = vrot.lane.b32.xlu0 %v358, 96
  %v360 = vpop.permute.xlu0 %359
  %vm361 = vcmask 1048320
  %s362 = scalar_lea.vmem %s1, 80
  %363 = vst.msk [vmem:[%s362] sm:$0xff] %vm361, %v360
  %s364 = scalar_lea.vmem %s0, 395
  %s365 = smov 3
  %v366 = vld [vmem:[%s364] ss:$16 sm:%s365]
  %s367 = scalar_lea.vmem %s0, 395
  %s368 = smov 12
  %v369 = vld [vmem:[%s367] ss:$16 sm:%s368]
  %vm370 = vcmask 1043458
  %v371 = vsel %vm370, %v369, %v366
  %s372 = scalar_lea.vmem %s0, 395
  %s373 = smov 48
  %v374 = vld [vmem:[%s372] ss:$16 sm:%s373]
  %vm375 = vcmask 1045508
  %v376 = vsel %vm375, %v374, %v371
  %s377 = scalar_lea.vmem %s0, 395
  %s378 = smov 192
  %v379 = vld [vmem:[%s377] ss:$16 sm:%s378]
  %vm380 = vcmask 1047558
  %v381 = vsel %vm380, %v379, %v376
  %382 = vrot.lane.b32.xlu0 %v381, 96
  %v383 = vpop.permute.xlu0 %382
  %vm384 = vcmask 1048320
  %s385 = scalar_lea.vmem %s1, 112
  %386 = vst.msk [vmem:[%s385] sm:$0xff] %vm384, %v383
  %s387 = scalar_lea.vmem %s0, 15
  %s388 = smov 3
  %v389 = vld [vmem:[%s387] ss:$16 sm:%s388]
  %s390 = scalar_lea.vmem %s0, 15
  %s391 = smov 12
  %v392 = vld [vmem:[%s390] ss:$16 sm:%s391]
  %vm393 = vcmask 1043458
  %v394 = vsel %vm393, %v392, %v389
  %s395 = scalar_lea.vmem %s0, 15
  %s396 = smov 48
  %v397 = vld [vmem:[%s395] ss:$16 sm:%s396]
  %vm398 = vcmask 1045508
  %v399 = vsel %vm398, %v397, %v394
  %s400 = scalar_lea.vmem %s0, 15
  %s401 = smov 192
  %v402 = vld [vmem:[%s400] ss:$16 sm:%s401]
  %vm403 = vcmask 1047558
  %v404 = vsel %vm403, %v402, %v399
  %405 = vrot.lane.b32.xlu0 %v404, 96
  %v406 = vpop.permute.xlu0 %405
  %vm407 = vcmask 1048320
  %s408 = scalar_lea.vmem %s1, 24
  %409 = vst.msk [vmem:[%s408] sm:$0xff] %vm407, %v406
  %s410 = scalar_lea.vmem %s0, 143
  %s411 = smov 3
  %v412 = vld [vmem:[%s410] ss:$16 sm:%s411]
  %s413 = scalar_lea.vmem %s0, 143
  %s414 = smov 12
  %v415 = vld [vmem:[%s413] ss:$16 sm:%s414]
  %vm416 = vcmask 1043458
  %v417 = vsel %vm416, %v415, %v412
  %s418 = scalar_lea.vmem %s0, 143
  %s419 = smov 48
  %v420 = vld [vmem:[%s418] ss:$16 sm:%s419]
  %vm421 = vcmask 1045508
  %v422 = vsel %vm421, %v420, %v417
  %s423 = scalar_lea.vmem %s0, 143
  %s424 = smov 192
  %v425 = vld [vmem:[%s423] ss:$16 sm:%s424]
  %vm426 = vcmask 1047558
  %v427 = vsel %vm426, %v425, %v422
  %428 = vrot.lane.b32.xlu0 %v427, 96
  %v429 = vpop.permute.xlu0 %428
  %vm430 = vcmask 1048320
  %s431 = scalar_lea.vmem %s1, 56
  %432 = vst.msk [vmem:[%s431] sm:$0xff] %vm430, %v429
  %s433 = scalar_lea.vmem %s0, 271
  %s434 = smov 3
  %v435 = vld [vmem:[%s433] ss:$16 sm:%s434]
  %s436 = scalar_lea.vmem %s0, 271
  %s437 = smov 12
  %v438 = vld [vmem:[%s436] ss:$16 sm:%s437]
  %vm439 = vcmask 1043458
  %v440 = vsel %vm439, %v438, %v435
  %s441 = scalar_lea.vmem %s0, 271
  %s442 = smov 48
  %v443 = vld [vmem:[%s441] ss:$16 sm:%s442]
  %vm444 = vcmask 1045508
  %v445 = vsel %vm444, %v443, %v440
  %s446 = scalar_lea.vmem %s0, 271
  %s447 = smov 192
  %v448 = vld [vmem:[%s446] ss:$16 sm:%s447]
  %vm449 = vcmask 1047558
  %v450 = vsel %vm449, %v448, %v445
  %451 = vrot.lane.b32.xlu0 %v450, 96
  %v452 = vpop.permute.xlu0 %451
  %vm453 = vcmask 1048320
  %s454 = scalar_lea.vmem %s1, 88
  %455 = vst.msk [vmem:[%s454] sm:$0xff] %vm453, %v452
  %s456 = scalar_lea.vmem %s0, 399
  %s457 = smov 3
  %v458 = vld [vmem:[%s456] ss:$16 sm:%s457]
  %s459 = scalar_lea.vmem %s0, 399
  %s460 = smov 12
  %v461 = vld [vmem:[%s459] ss:$16 sm:%s460]
  %vm462 = vcmask 1043458
  %v463 = vsel %vm462, %v461, %v458
  %s464 = scalar_lea.vmem %s0, 399
  %s465 = smov 48
  %v466 = vld [vmem:[%s464] ss:$16 sm:%s465]
  %vm467 = vcmask 1045508
  %v468 = vsel %vm467, %v466, %v463
  %s469 = scalar_lea.vmem %s0, 399
  %s470 = smov 192
  %v471 = vld [vmem:[%s469] ss:$16 sm:%s470]
  %vm472 = vcmask 1047558
  %v473 = vsel %vm472, %v471, %v468
  %474 = vrot.lane.b32.xlu0 %v473, 96
  %v475 = vpop.permute.xlu0 %474
  %vm476 = vcmask 1048320
  %s477 = scalar_lea.vmem %s1, 120
  %478 = vst.msk [vmem:[%s477] sm:$0xff] %vm476, %v475
  %s479 = scalar_lea.vmem %s0, 2
  %s480 = smov 3
  %v481 = vld [vmem:[%s479] ss:$16 sm:%s480]
  %s482 = scalar_lea.vmem %s0, 2
  %s483 = smov 12
  %v484 = vld [vmem:[%s482] ss:$16 sm:%s483]
  %vm485 = vcmask 1043458
  %v486 = vsel %vm485, %v484, %v481
  %s487 = scalar_lea.vmem %s0, 2
  %s488 = smov 48
  %v489 = vld [vmem:[%s487] ss:$16 sm:%s488]
  %vm490 = vcmask 1045508
  %v491 = vsel %vm490, %v489, %v486
  %s492 = scalar_lea.vmem %s0, 2
  %s493 = smov 192
  %v494 = vld [vmem:[%s492] ss:$16 sm:%s493]
  %vm495 = vcmask 1047558
  %v496 = vsel %vm495, %v494, %v491
  %497 = vrot.lane.b32.xlu0 %v496, 64
  %v498 = vpop.permute.xlu0 %497
  %vm499 = vcmask 785920
  %500 = vst.msk [vmem:[%s1] sm:$0xff] %vm499, %v498
  %s501 = scalar_lea.vmem %s0, 130
  %s502 = smov 3
  %v503 = vld [vmem:[%s501] ss:$16 sm:%s502]
  %s504 = scalar_lea.vmem %s0, 130
  %s505 = smov 12
  %v506 = vld [vmem:[%s504] ss:$16 sm:%s505]
  %vm507 = vcmask 1043458
  %v508 = vsel %vm507, %v506, %v503
  %s509 = scalar_lea.vmem %s0, 130
  %s510 = smov 48
  %v511 = vld [vmem:[%s509] ss:$16 sm:%s510]
  %vm512 = vcmask 1045508
  %v513 = vsel %vm512, %v511, %v508
  %s514 = scalar_lea.vmem %s0, 130
  %s515 = smov 192
  %v516 = vld [vmem:[%s514] ss:$16 sm:%s515]
  %vm517 = vcmask 1047558
  %v518 = vsel %vm517, %v516, %v513
  %519 = vrot.lane.b32.xlu0 %v518, 64
  %v520 = vpop.permute.xlu0 %519
  %vm521 = vcmask 785920
  %s522 = scalar_lea.vmem %s1, 32
  %523 = vst.msk [vmem:[%s522] sm:$0xff] %vm521, %v520
  %s524 = scalar_lea.vmem %s0, 258
  %s525 = smov 3
  %v526 = vld [vmem:[%s524] ss:$16 sm:%s525]
  %s527 = scalar_lea.vmem %s0, 258
  %s528 = smov 12
  %v529 = vld [vmem:[%s527] ss:$16 sm:%s528]
  %vm530 = vcmask 1043458
  %v531 = vsel %vm530, %v529, %v526
  %s532 = scalar_lea.vmem %s0, 258
  %s533 = smov 48
  %v534 = vld [vmem:[%s532] ss:$16 sm:%s533]
  %vm535 = vcmask 1045508
  %v536 = vsel %vm535, %v534, %v531
  %s537 = scalar_lea.vmem %s0, 258
  %s538 = smov 192
  %v539 = vld [vmem:[%s537] ss:$16 sm:%s538]
  %vm540 = vcmask 1047558
  %v541 = vsel %vm540, %v539, %v536
  %542 = vrot.lane.b32.xlu0 %v541, 64
  %v543 = vpop.permute.xlu0 %542
  %vm544 = vcmask 785920
  %s545 = scalar_lea.vmem %s1, 64
  %546 = vst.msk [vmem:[%s545] sm:$0xff] %vm544, %v543
  %s547 = scalar_lea.vmem %s0, 386
  %s548 = smov 3
  %v549 = vld [vmem:[%s547] ss:$16 sm:%s548]
  %s550 = scalar_lea.vmem %s0, 386
  %s551 = smov 12
  %v552 = vld [vmem:[%s550] ss:$16 sm:%s551]
  %vm553 = vcmask 1043458
  %v554 = vsel %vm553, %v552, %v549
  %s555 = scalar_lea.vmem %s0, 386
  %s556 = smov 48
  %v557 = vld [vmem:[%s555] ss:$16 sm:%s556]
  %vm558 = vcmask 1045508
  %v559 = vsel %vm558, %v557, %v554
  %s560 = scalar_lea.vmem %s0, 386
  %s561 = smov 192
  %v562 = vld [vmem:[%s560] ss:$16 sm:%s561]
  %vm563 = vcmask 1047558
  %v564 = vsel %vm563, %v562, %v559
  %565 = vrot.lane.b32.xlu0 %v564, 64
  %v566 = vpop.permute.xlu0 %565
  %vm567 = vcmask 785920
  %s568 = scalar_lea.vmem %s1, 96
  %569 = vst.msk [vmem:[%s568] sm:$0xff] %vm567, %v566
  %s570 = scalar_lea.vmem %s0, 6
  %s571 = smov 3
  %v572 = vld [vmem:[%s570] ss:$16 sm:%s571]
  %s573 = scalar_lea.vmem %s0, 6
  %s574 = smov 12
  %v575 = vld [vmem:[%s573] ss:$16 sm:%s574]
  %vm576 = vcmask 1043458
  %v577 = vsel %vm576, %v575, %v572
  %s578 = scalar_lea.vmem %s0, 6
  %s579 = smov 48
  %v580 = vld [vmem:[%s578] ss:$16 sm:%s579]
  %vm581 = vcmask 1045508
  %v582 = vsel %vm581, %v580, %v577
  %s583 = scalar_lea.vmem %s0, 6
  %s584 = smov 192
  %v585 = vld [vmem:[%s583] ss:$16 sm:%s584]
  %vm586 = vcmask 1047558
  %v587 = vsel %vm586, %v585, %v582
  %588 = vrot.lane.b32.xlu0 %v587, 64
  %v589 = vpop.permute.xlu0 %588
  %vm590 = vcmask 785920
  %s591 = scalar_lea.vmem %s1, 8
  %592 = vst.msk [vmem:[%s591] sm:$0xff] %vm590, %v589
  %s593 = scalar_lea.vmem %s0, 134
  %s594 = smov 3
  %v595 = vld [vmem:[%s593] ss:$16 sm:%s594]
  %s596 = scalar_lea.vmem %s0, 134
  %s597 = smov 12
  %v598 = vld [vmem:[%s596] ss:$16 sm:%s597]
  %vm599 = vcmask 1043458
  %v600 = vsel %vm599, %v598, %v595
  %s601 = scalar_lea.vmem %s0, 134
  %s602 = smov 48
  %v603 = vld [vmem:[%s601] ss:$16 sm:%s602]
  %vm604 = vcmask 1045508
  %v605 = vsel %vm604, %v603, %v600
  %s606 = scalar_lea.vmem %s0, 134
  %s607 = smov 192
  %v608 = vld [vmem:[%s606] ss:$16 sm:%s607]
  %vm609 = vcmask 1047558
  %v610 = vsel %vm609, %v608, %v605
  %611 = vrot.lane.b32.xlu0 %v610, 64
  %v612 = vpop.permute.xlu0 %611
  %vm613 = vcmask 785920
  %s614 = scalar_lea.vmem %s1, 40
  %615 = vst.msk [vmem:[%s614] sm:$0xff] %vm613, %v612
  %s616 = scalar_lea.vmem %s0, 262
  %s617 = smov 3
  %v618 = vld [vmem:[%s616] ss:$16 sm:%s617]
  %s619 = scalar_lea.vmem %s0, 262
  %s620 = smov 12
  %v621 = vld [vmem:[%s619] ss:$16 sm:%s620]
  %vm622 = vcmask 1043458
  %v623 = vsel %vm622, %v621, %v618
  %s624 = scalar_lea.vmem %s0, 262
  %s625 = smov 48
  %v626 = vld [vmem:[%s624] ss:$16 sm:%s625]
  %vm627 = vcmask 1045508
  %v628 = vsel %vm627, %v626, %v623
  %s629 = scalar_lea.vmem %s0, 262
  %s630 = smov 192
  %v631 = vld [vmem:[%s629] ss:$16 sm:%s630]
  %vm632 = vcmask 1047558
  %v633 = vsel %vm632, %v631, %v628
  %634 = vrot.lane.b32.xlu0 %v633, 64
  %v635 = vpop.permute.xlu0 %634
  %vm636 = vcmask 785920
  %s637 = scalar_lea.vmem %s1, 72
  %638 = vst.msk [vmem:[%s637] sm:$0xff] %vm636, %v635
  %s639 = scalar_lea.vmem %s0, 390
  %s640 = smov 3
  %v641 = vld [vmem:[%s639] ss:$16 sm:%s640]
  %s642 = scalar_lea.vmem %s0, 390
  %s643 = smov 12
  %v644 = vld [vmem:[%s642] ss:$16 sm:%s643]
  %vm645 = vcmask 1043458
  %v646 = vsel %vm645, %v644, %v641
  %s647 = scalar_lea.vmem %s0, 390
  %s648 = smov 48
  %v649 = vld [vmem:[%s647] ss:$16 sm:%s648]
  %vm650 = vcmask 1045508
  %v651 = vsel %vm650, %v649, %v646
  %s652 = scalar_lea.vmem %s0, 390
  %s653 = smov 192
  %v654 = vld [vmem:[%s652] ss:$16 sm:%s653]
  %vm655 = vcmask 1047558
  %v656 = vsel %vm655, %v654, %v651
  %657 = vrot.lane.b32.xlu0 %v656, 64
  %v658 = vpop.permute.xlu0 %657
  %vm659 = vcmask 785920
  %s660 = scalar_lea.vmem %s1, 104
  %661 = vst.msk [vmem:[%s660] sm:$0xff] %vm659, %v658
  %s662 = scalar_lea.vmem %s0, 10
  %s663 = smov 3
  %v664 = vld [vmem:[%s662] ss:$16 sm:%s663]
  %s665 = scalar_lea.vmem %s0, 10
  %s666 = smov 12
  %v667 = vld [vmem:[%s665] ss:$16 sm:%s666]
  %vm668 = vcmask 1043458
  %v669 = vsel %vm668, %v667, %v664
  %s670 = scalar_lea.vmem %s0, 10
  %s671 = smov 48
  %v672 = vld [vmem:[%s670] ss:$16 sm:%s671]
  %vm673 = vcmask 1045508
  %v674 = vsel %vm673, %v672, %v669
  %s675 = scalar_lea.vmem %s0, 10
  %s676 = smov 192
  %v677 = vld [vmem:[%s675] ss:$16 sm:%s676]
  %vm678 = vcmask 1047558
  %v679 = vsel %vm678, %v677, %v674
  %680 = vrot.lane.b32.xlu0 %v679, 64
  %v681 = vpop.permute.xlu0 %680
  %vm682 = vcmask 785920
  %s683 = scalar_lea.vmem %s1, 16
  %684 = vst.msk [vmem:[%s683] sm:$0xff] %vm682, %v681
  %s685 = scalar_lea.vmem %s0, 138
  %s686 = smov 3
  %v687 = vld [vmem:[%s685] ss:$16 sm:%s686]
  %s688 = scalar_lea.vmem %s0, 138
  %s689 = smov 12
  %v690 = vld [vmem:[%s688] ss:$16 sm:%s689]
  %vm691 = vcmask 1043458
  %v692 = vsel %vm691, %v690, %v687
  %s693 = scalar_lea.vmem %s0, 138
  %s694 = smov 48
  %v695 = vld [vmem:[%s693] ss:$16 sm:%s694]
  %vm696 = vcmask 1045508
  %v697 = vsel %vm696, %v695, %v692
  %s698 = scalar_lea.vmem %s0, 138
  %s699 = smov 192
  %v700 = vld [vmem:[%s698] ss:$16 sm:%s699]
  %vm701 = vcmask 1047558
  %v702 = vsel %vm701, %v700, %v697
  %703 = vrot.lane.b32.xlu0 %v702, 64
  %v704 = vpop.permute.xlu0 %703
  %vm705 = vcmask 785920
  %s706 = scalar_lea.vmem %s1, 48
  %707 = vst.msk [vmem:[%s706] sm:$0xff] %vm705, %v704
  %s708 = scalar_lea.vmem %s0, 266
  %s709 = smov 3
  %v710 = vld [vmem:[%s708] ss:$16 sm:%s709]
  %s711 = scalar_lea.vmem %s0, 266
  %s712 = smov 12
  %v713 = vld [vmem:[%s711] ss:$16 sm:%s712]
  %vm714 = vcmask 1043458
  %v715 = vsel %vm714, %v713, %v710
  %s716 = scalar_lea.vmem %s0, 266
  %s717 = smov 48
  %v718 = vld [vmem:[%s716] ss:$16 sm:%s717]
  %vm719 = vcmask 1045508
  %v720 = vsel %vm719, %v718, %v715
  %s721 = scalar_lea.vmem %s0, 266
  %s722 = smov 192
  %v723 = vld [vmem:[%s721] ss:$16 sm:%s722]
  %vm724 = vcmask 1047558
  %v725 = vsel %vm724, %v723, %v720
  %726 = vrot.lane.b32.xlu0 %v725, 64
  %v727 = vpop.permute.xlu0 %726
  %vm728 = vcmask 785920
  %s729 = scalar_lea.vmem %s1, 80
  %730 = vst.msk [vmem:[%s729] sm:$0xff] %vm728, %v727
  %s731 = scalar_lea.vmem %s0, 394
  %s732 = smov 3
  %v733 = vld [vmem:[%s731] ss:$16 sm:%s732]
  %s734 = scalar_lea.vmem %s0, 394
  %s735 = smov 12
  %v736 = vld [vmem:[%s734] ss:$16 sm:%s735]
  %vm737 = vcmask 1043458
  %v738 = vsel %vm737, %v736, %v733
  %s739 = scalar_lea.vmem %s0, 394
  %s740 = smov 48
  %v741 = vld [vmem:[%s739] ss:$16 sm:%s740]
  %vm742 = vcmask 1045508
  %v743 = vsel %vm742, %v741, %v738
  %s744 = scalar_lea.vmem %s0, 394
  %s745 = smov 192
  %v746 = vld [vmem:[%s744] ss:$16 sm:%s745]
  %vm747 = vcmask 1047558
  %v748 = vsel %vm747, %v746, %v743
  %749 = vrot.lane.b32.xlu0 %v748, 64
  %v750 = vpop.permute.xlu0 %749
  %vm751 = vcmask 785920
  %s752 = scalar_lea.vmem %s1, 112
  %753 = vst.msk [vmem:[%s752] sm:$0xff] %vm751, %v750
  %s754 = scalar_lea.vmem %s0, 14
  %s755 = smov 3
  %v756 = vld [vmem:[%s754] ss:$16 sm:%s755]
  %s757 = scalar_lea.vmem %s0, 14
  %s758 = smov 12
  %v759 = vld [vmem:[%s757] ss:$16 sm:%s758]
  %vm760 = vcmask 1043458
  %v761 = vsel %vm760, %v759, %v756
  %s762 = scalar_lea.vmem %s0, 14
  %s763 = smov 48
  %v764 = vld [vmem:[%s762] ss:$16 sm:%s763]
  %vm765 = vcmask 1045508
  %v766 = vsel %vm765, %v764, %v761
  %s767 = scalar_lea.vmem %s0, 14
  %s768 = smov 192
  %v769 = vld [vmem:[%s767] ss:$16 sm:%s768]
  %vm770 = vcmask 1047558
  %v771 = vsel %vm770, %v769, %v766
  %772 = vrot.lane.b32.xlu0 %v771, 64
  %v773 = vpop.permute.xlu0 %772
  %vm774 = vcmask 785920
  %s775 = scalar_lea.vmem %s1, 24
  %776 = vst.msk [vmem:[%s775] sm:$0xff] %vm774, %v773
  %s777 = scalar_lea.vmem %s0, 142
  %s778 = smov 3
  %v779 = vld [vmem:[%s777] ss:$16 sm:%s778]
  %s780 = scalar_lea.vmem %s0, 142
  %s781 = smov 12
  %v782 = vld [vmem:[%s780] ss:$16 sm:%s781]
  %vm783 = vcmask 1043458
  %v784 = vsel %vm783, %v782, %v779
  %s785 = scalar_lea.vmem %s0, 142
  %s786 = smov 48
  %v787 = vld [vmem:[%s785] ss:$16 sm:%s786]
  %vm788 = vcmask 1045508
  %v789 = vsel %vm788, %v787, %v784
  %s790 = scalar_lea.vmem %s0, 142
  %s791 = smov 192
  %v792 = vld [vmem:[%s790] ss:$16 sm:%s791]
  %vm793 = vcmask 1047558
  %v794 = vsel %vm793, %v792, %v789
  %795 = vrot.lane.b32.xlu0 %v794, 64
  %v796 = vpop.permute.xlu0 %795
  %vm797 = vcmask 785920
  %s798 = scalar_lea.vmem %s1, 56
  %799 = vst.msk [vmem:[%s798] sm:$0xff] %vm797, %v796
  %s800 = scalar_lea.vmem %s0, 270
  %s801 = smov 3
  %v802 = vld [vmem:[%s800] ss:$16 sm:%s801]
  %s803 = scalar_lea.vmem %s0, 270
  %s804 = smov 12
  %v805 = vld [vmem:[%s803] ss:$16 sm:%s804]
  %vm806 = vcmask 1043458
  %v807 = vsel %vm806, %v805, %v802
  %s808 = scalar_lea.vmem %s0, 270
  %s809 = smov 48
  %v810 = vld [vmem:[%s808] ss:$16 sm:%s809]
  %vm811 = vcmask 1045508
  %v812 = vsel %vm811, %v810, %v807
  %s813 = scalar_lea.vmem %s0, 270
  %s814 = smov 192
  %v815 = vld [vmem:[%s813] ss:$16 sm:%s814]
  %vm816 = vcmask 1047558
  %v817 = vsel %vm816, %v815, %v812
  %818 = vrot.lane.b32.xlu0 %v817, 64
  %v819 = vpop.permute.xlu0 %818
  %vm820 = vcmask 785920
  %s821 = scalar_lea.vmem %s1, 88
  %822 = vst.msk [vmem:[%s821] sm:$0xff] %vm820, %v819
  %s823 = scalar_lea.vmem %s0, 398
  %s824 = smov 3
  %v825 = vld [vmem:[%s823] ss:$16 sm:%s824]
  %s826 = scalar_lea.vmem %s0, 398
  %s827 = smov 12
  %v828 = vld [vmem:[%s826] ss:$16 sm:%s827]
  %vm829 = vcmask 1043458
  %v830 = vsel %vm829, %v828, %v825
  %s831 = scalar_lea.vmem %s0, 398
  %s832 = smov 48
  %v833 = vld [vmem:[%s831] ss:$16 sm:%s832]
  %vm834 = vcmask 1045508
  %v835 = vsel %vm834, %v833, %v830
  %s836 = scalar_lea.vmem %s0, 398
  %s837 = smov 192
  %v838 = vld [vmem:[%s836] ss:$16 sm:%s837]
  %vm839 = vcmask 1047558
  %v840 = vsel %vm839, %v838, %v835
  %841 = vrot.lane.b32.xlu0 %v840, 64
  %v842 = vpop.permute.xlu0 %841
  %vm843 = vcmask 785920
  %s844 = scalar_lea.vmem %s1, 120
  %845 = vst.msk [vmem:[%s844] sm:$0xff] %vm843, %v842
  %s846 = scalar_lea.vmem %s0, 1
  %s847 = smov 3
  %v848 = vld [vmem:[%s846] ss:$16 sm:%s847]
  %s849 = scalar_lea.vmem %s0, 1
  %s850 = smov 12
  %v851 = vld [vmem:[%s849] ss:$16 sm:%s850]
  %vm852 = vcmask 1043458
  %v853 = vsel %vm852, %v851, %v848
  %s854 = scalar_lea.vmem %s0, 1
  %s855 = smov 48
  %v856 = vld [vmem:[%s854] ss:$16 sm:%s855]
  %vm857 = vcmask 1045508
  %v858 = vsel %vm857, %v856, %v853
  %s859 = scalar_lea.vmem %s0, 1
  %s860 = smov 192
  %v861 = vld [vmem:[%s859] ss:$16 sm:%s860]
  %vm862 = vcmask 1047558
  %v863 = vsel %vm862, %v861, %v858
  %864 = vrot.lane.b32.xlu0 %v863, 32
  %v865 = vpop.permute.xlu0 %864
  %vm866 = vcmask 523520
  %867 = vst.msk [vmem:[%s1] sm:$0xff] %vm866, %v865
  %s868 = scalar_lea.vmem %s0, 129
  %s869 = smov 3
  %v870 = vld [vmem:[%s868] ss:$16 sm:%s869]
  %s871 = scalar_lea.vmem %s0, 129
  %s872 = smov 12
  %v873 = vld [vmem:[%s871] ss:$16 sm:%s872]
  %vm874 = vcmask 1043458
  %v875 = vsel %vm874, %v873, %v870
  %s876 = scalar_lea.vmem %s0, 129
  %s877 = smov 48
  %v878 = vld [vmem:[%s876] ss:$16 sm:%s877]
  %vm879 = vcmask 1045508
  %v880 = vsel %vm879, %v878, %v875
  %s881 = scalar_lea.vmem %s0, 129
  %s882 = smov 192
  %v883 = vld [vmem:[%s881] ss:$16 sm:%s882]
  %vm884 = vcmask 1047558
  %v885 = vsel %vm884, %v883, %v880
  %886 = vrot.lane.b32.xlu0 %v885, 32
  %v887 = vpop.permute.xlu0 %886
  %vm888 = vcmask 523520
  %s889 = scalar_lea.vmem %s1, 32
  %890 = vst.msk [vmem:[%s889] sm:$0xff] %vm888, %v887
  %s891 = scalar_lea.vmem %s0, 257
  %s892 = smov 3
  %v893 = vld [vmem:[%s891] ss:$16 sm:%s892]
  %s894 = scalar_lea.vmem %s0, 257
  %s895 = smov 12
  %v896 = vld [vmem:[%s894] ss:$16 sm:%s895]
  %vm897 = vcmask 1043458
  %v898 = vsel %vm897, %v896, %v893
  %s899 = scalar_lea.vmem %s0, 257
  %s900 = smov 48
  %v901 = vld [vmem:[%s899] ss:$16 sm:%s900]
  %vm902 = vcmask 1045508
  %v903 = vsel %vm902, %v901, %v898
  %s904 = scalar_lea.vmem %s0, 257
  %s905 = smov 192
  %v906 = vld [vmem:[%s904] ss:$16 sm:%s905]
  %vm907 = vcmask 1047558
  %v908 = vsel %vm907, %v906, %v903
  %909 = vrot.lane.b32.xlu0 %v908, 32
  %v910 = vpop.permute.xlu0 %909
  %vm911 = vcmask 523520
  %s912 = scalar_lea.vmem %s1, 64
  %913 = vst.msk [vmem:[%s912] sm:$0xff] %vm911, %v910
  %s914 = scalar_lea.vmem %s0, 385
  %s915 = smov 3
  %v916 = vld [vmem:[%s914] ss:$16 sm:%s915]
  %s917 = scalar_lea.vmem %s0, 385
  %s918 = smov 12
  %v919 = vld [vmem:[%s917] ss:$16 sm:%s918]
  %vm920 = vcmask 1043458
  %v921 = vsel %vm920, %v919, %v916
  %s922 = scalar_lea.vmem %s0, 385
  %s923 = smov 48
  %v924 = vld [vmem:[%s922] ss:$16 sm:%s923]
  %vm925 = vcmask 1045508
  %v926 = vsel %vm925, %v924, %v921
  %s927 = scalar_lea.vmem %s0, 385
  %s928 = smov 192
  %v929 = vld [vmem:[%s927] ss:$16 sm:%s928]
  %vm930 = vcmask 1047558
  %v931 = vsel %vm930, %v929, %v926
  %932 = vrot.lane.b32.xlu0 %v931, 32
  %v933 = vpop.permute.xlu0 %932
  %vm934 = vcmask 523520
  %s935 = scalar_lea.vmem %s1, 96
  %936 = vst.msk [vmem:[%s935] sm:$0xff] %vm934, %v933
  %s937 = scalar_lea.vmem %s0, 5
  %s938 = smov 3
  %v939 = vld [vmem:[%s937] ss:$16 sm:%s938]
  %s940 = scalar_lea.vmem %s0, 5
  %s941 = smov 12
  %v942 = vld [vmem:[%s940] ss:$16 sm:%s941]
  %vm943 = vcmask 1043458
  %v944 = vsel %vm943, %v942, %v939
  %s945 = scalar_lea.vmem %s0, 5
  %s946 = smov 48
  %v947 = vld [vmem:[%s945] ss:$16 sm:%s946]
  %vm948 = vcmask 1045508
  %v949 = vsel %vm948, %v947, %v944
  %s950 = scalar_lea.vmem %s0, 5
  %s951 = smov 192
  %v952 = vld [vmem:[%s950] ss:$16 sm:%s951]
  %vm953 = vcmask 1047558
  %v954 = vsel %vm953, %v952, %v949
  %955 = vrot.lane.b32.xlu0 %v954, 32
  %v956 = vpop.permute.xlu0 %955
  %vm957 = vcmask 523520
  %s958 = scalar_lea.vmem %s1, 8
  %959 = vst.msk [vmem:[%s958] sm:$0xff] %vm957, %v956
  %s960 = scalar_lea.vmem %s0, 133
  %s961 = smov 3
  %v962 = vld [vmem:[%s960] ss:$16 sm:%s961]
  %s963 = scalar_lea.vmem %s0, 133
  %s964 = smov 12
  %v965 = vld [vmem:[%s963] ss:$16 sm:%s964]
  %vm966 = vcmask 1043458
  %v967 = vsel %vm966, %v965, %v962
  %s968 = scalar_lea.vmem %s0, 133
  %s969 = smov 48
  %v970 = vld [vmem:[%s968] ss:$16 sm:%s969]
  %vm971 = vcmask 1045508
  %v972 = vsel %vm971, %v970, %v967
  %s973 = scalar_lea.vmem %s0, 133
  %s974 = smov 192
  %v975 = vld [vmem:[%s973] ss:$16 sm:%s974]
  %vm976 = vcmask 1047558
  %v977 = vsel %vm976, %v975, %v972
  %978 = vrot.lane.b32.xlu0 %v977, 32
  %v979 = vpop.permute.xlu0 %978
  %vm980 = vcmask 523520
  %s981 = scalar_lea.vmem %s1, 40
  %982 = vst.msk [vmem:[%s981] sm:$0xff] %vm980, %v979
  %s983 = scalar_lea.vmem %s0, 261
  %s984 = smov 3
  %v985 = vld [vmem:[%s983] ss:$16 sm:%s984]
  %s986 = scalar_lea.vmem %s0, 261
  %s987 = smov 12
  %v988 = vld [vmem:[%s986] ss:$16 sm:%s987]
  %vm989 = vcmask 1043458
  %v990 = vsel %vm989, %v988, %v985
  %s991 = scalar_lea.vmem %s0, 261
  %s992 = smov 48
  %v993 = vld [vmem:[%s991] ss:$16 sm:%s992]
  %vm994 = vcmask 1045508
  %v995 = vsel %vm994, %v993, %v990
  %s996 = scalar_lea.vmem %s0, 261
  %s997 = smov 192
  %v998 = vld [vmem:[%s996] ss:$16 sm:%s997]
  %vm999 = vcmask 1047558
  %v1000 = vsel %vm999, %v998, %v995
  %1001 = vrot.lane.b32.xlu0 %v1000, 32
  %v1002 = vpop.permute.xlu0 %1001
  %vm1003 = vcmask 523520
  %s1004 = scalar_lea.vmem %s1, 72
  %1005 = vst.msk [vmem:[%s1004] sm:$0xff] %vm1003, %v1002
  %s1006 = scalar_lea.vmem %s0, 389
  %s1007 = smov 3
  %v1008 = vld [vmem:[%s1006] ss:$16 sm:%s1007]
  %s1009 = scalar_lea.vmem %s0, 389
  %s1010 = smov 12
  %v1011 = vld [vmem:[%s1009] ss:$16 sm:%s1010]
  %vm1012 = vcmask 1043458
  %v1013 = vsel %vm1012, %v1011, %v1008
  %s1014 = scalar_lea.vmem %s0, 389
  %s1015 = smov 48
  %v1016 = vld [vmem:[%s1014] ss:$16 sm:%s1015]
  %vm1017 = vcmask 1045508
  %v1018 = vsel %vm1017, %v1016, %v1013
  %s1019 = scalar_lea.vmem %s0, 389
  %s1020 = smov 192
  %v1021 = vld [vmem:[%s1019] ss:$16 sm:%s1020]
  %vm1022 = vcmask 1047558
  %v1023 = vsel %vm1022, %v1021, %v1018
  %1024 = vrot.lane.b32.xlu0 %v1023, 32
  %v1025 = vpop.permute.xlu0 %1024
  %vm1026 = vcmask 523520
  %s1027 = scalar_lea.vmem %s1, 104
  %1028 = vst.msk [vmem:[%s1027] sm:$0xff] %vm1026, %v1025
  %s1029 = scalar_lea.vmem %s0, 9
  %s1030 = smov 3
  %v1031 = vld [vmem:[%s1029] ss:$16 sm:%s1030]
  %s1032 = scalar_lea.vmem %s0, 9
  %s1033 = smov 12
  %v1034 = vld [vmem:[%s1032] ss:$16 sm:%s1033]
  %vm1035 = vcmask 1043458
  %v1036 = vsel %vm1035, %v1034, %v1031
  %s1037 = scalar_lea.vmem %s0, 9
  %s1038 = smov 48
  %v1039 = vld [vmem:[%s1037] ss:$16 sm:%s1038]
  %vm1040 = vcmask 1045508
  %v1041 = vsel %vm1040, %v1039, %v1036
  %s1042 = scalar_lea.vmem %s0, 9
  %s1043 = smov 192
  %v1044 = vld [vmem:[%s1042] ss:$16 sm:%s1043]
  %vm1045 = vcmask 1047558
  %v1046 = vsel %vm1045, %v1044, %v1041
  %1047 = vrot.lane.b32.xlu0 %v1046, 32
  %v1048 = vpop.permute.xlu0 %1047
  %vm1049 = vcmask 523520
  %s1050 = scalar_lea.vmem %s1, 16
  %1051 = vst.msk [vmem:[%s1050] sm:$0xff] %vm1049, %v1048
  %s1052 = scalar_lea.vmem %s0, 137
  %s1053 = smov 3
  %v1054 = vld [vmem:[%s1052] ss:$16 sm:%s1053]
  %s1055 = scalar_lea.vmem %s0, 137
  %s1056 = smov 12
  %v1057 = vld [vmem:[%s1055] ss:$16 sm:%s1056]
  %vm1058 = vcmask 1043458
  %v1059 = vsel %vm1058, %v1057, %v1054
  %s1060 = scalar_lea.vmem %s0, 137
  %s1061 = smov 48
  %v1062 = vld [vmem:[%s1060] ss:$16 sm:%s1061]
  %vm1063 = vcmask 1045508
  %v1064 = vsel %vm1063, %v1062, %v1059
  %s1065 = scalar_lea.vmem %s0, 137
  %s1066 = smov 192
  %v1067 = vld [vmem:[%s1065] ss:$16 sm:%s1066]
  %vm1068 = vcmask 1047558
  %v1069 = vsel %vm1068, %v1067, %v1064
  %1070 = vrot.lane.b32.xlu0 %v1069, 32
  %v1071 = vpop.permute.xlu0 %1070
  %vm1072 = vcmask 523520
  %s1073 = scalar_lea.vmem %s1, 48
  %1074 = vst.msk [vmem:[%s1073] sm:$0xff] %vm1072, %v1071
  %s1075 = scalar_lea.vmem %s0, 265
  %s1076 = smov 3
  %v1077 = vld [vmem:[%s1075] ss:$16 sm:%s1076]
  %s1078 = scalar_lea.vmem %s0, 265
  %s1079 = smov 12
  %v1080 = vld [vmem:[%s1078] ss:$16 sm:%s1079]
  %vm1081 = vcmask 1043458
  %v1082 = vsel %vm1081, %v1080, %v1077
  %s1083 = scalar_lea.vmem %s0, 265
  %s1084 = smov 48
  %v1085 = vld [vmem:[%s1083] ss:$16 sm:%s1084]
  %vm1086 = vcmask 1045508
  %v1087 = vsel %vm1086, %v1085, %v1082
  %s1088 = scalar_lea.vmem %s0, 265
  %s1089 = smov 192
  %v1090 = vld [vmem:[%s1088] ss:$16 sm:%s1089]
  %vm1091 = vcmask 1047558
  %v1092 = vsel %vm1091, %v1090, %v1087
  %1093 = vrot.lane.b32.xlu0 %v1092, 32
  %v1094 = vpop.permute.xlu0 %1093
  %vm1095 = vcmask 523520
  %s1096 = scalar_lea.vmem %s1, 80
  %1097 = vst.msk [vmem:[%s1096] sm:$0xff] %vm1095, %v1094
  %s1098 = scalar_lea.vmem %s0, 393
  %s1099 = smov 3
  %v1100 = vld [vmem:[%s1098] ss:$16 sm:%s1099]
  %s1101 = scalar_lea.vmem %s0, 393
  %s1102 = smov 12
  %v1103 = vld [vmem:[%s1101] ss:$16 sm:%s1102]
  %vm1104 = vcmask 1043458
  %v1105 = vsel %vm1104, %v1103, %v1100
  %s1106 = scalar_lea.vmem %s0, 393
  %s1107 = smov 48
  %v1108 = vld [vmem:[%s1106] ss:$16 sm:%s1107]
  %vm1109 = vcmask 1045508
  %v1110 = vsel %vm1109, %v1108, %v1105
  %s1111 = scalar_lea.vmem %s0, 393
  %s1112 = smov 192
  %v1113 = vld [vmem:[%s1111] ss:$16 sm:%s1112]
  %vm1114 = vcmask 1047558
  %v1115 = vsel %vm1114, %v1113, %v1110
  %1116 = vrot.lane.b32.xlu0 %v1115, 32
  %v1117 = vpop.permute.xlu0 %1116
  %vm1118 = vcmask 523520
  %s1119 = scalar_lea.vmem %s1, 112
  %1120 = vst.msk [vmem:[%s1119] sm:$0xff] %vm1118, %v1117
  %s1121 = scalar_lea.vmem %s0, 13
  %s1122 = smov 3
  %v1123 = vld [vmem:[%s1121] ss:$16 sm:%s1122]
  %s1124 = scalar_lea.vmem %s0, 13
  %s1125 = smov 12
  %v1126 = vld [vmem:[%s1124] ss:$16 sm:%s1125]
  %vm1127 = vcmask 1043458
  %v1128 = vsel %vm1127, %v1126, %v1123
  %s1129 = scalar_lea.vmem %s0, 13
  %s1130 = smov 48
  %v1131 = vld [vmem:[%s1129] ss:$16 sm:%s1130]
  %vm1132 = vcmask 1045508
  %v1133 = vsel %vm1132, %v1131, %v1128
  %s1134 = scalar_lea.vmem %s0, 13
  %s1135 = smov 192
  %v1136 = vld [vmem:[%s1134] ss:$16 sm:%s1135]
  %vm1137 = vcmask 1047558
  %v1138 = vsel %vm1137, %v1136, %v1133
  %1139 = vrot.lane.b32.xlu0 %v1138, 32
  %v1140 = vpop.permute.xlu0 %1139
  %vm1141 = vcmask 523520
  %s1142 = scalar_lea.vmem %s1, 24
  %1143 = vst.msk [vmem:[%s1142] sm:$0xff] %vm1141, %v1140
  %s1144 = scalar_lea.vmem %s0, 141
  %s1145 = smov 3
  %v1146 = vld [vmem:[%s1144] ss:$16 sm:%s1145]
  %s1147 = scalar_lea.vmem %s0, 141
  %s1148 = smov 12
  %v1149 = vld [vmem:[%s1147] ss:$16 sm:%s1148]
  %vm1150 = vcmask 1043458
  %v1151 = vsel %vm1150, %v1149, %v1146
  %s1152 = scalar_lea.vmem %s0, 141
  %s1153 = smov 48
  %v1154 = vld [vmem:[%s1152] ss:$16 sm:%s1153]
  %vm1155 = vcmask 1045508
  %v1156 = vsel %vm1155, %v1154, %v1151
  %s1157 = scalar_lea.vmem %s0, 141
  %s1158 = smov 192
  %v1159 = vld [vmem:[%s1157] ss:$16 sm:%s1158]
  %vm1160 = vcmask 1047558
  %v1161 = vsel %vm1160, %v1159, %v1156
  %1162 = vrot.lane.b32.xlu0 %v1161, 32
  %v1163 = vpop.permute.xlu0 %1162
  %vm1164 = vcmask 523520
  %s1165 = scalar_lea.vmem %s1, 56
  %1166 = vst.msk [vmem:[%s1165] sm:$0xff] %vm1164, %v1163
  %s1167 = scalar_lea.vmem %s0, 269
  %s1168 = smov 3
  %v1169 = vld [vmem:[%s1167] ss:$16 sm:%s1168]
  %s1170 = scalar_lea.vmem %s0, 269
  %s1171 = smov 12
  %v1172 = vld [vmem:[%s1170] ss:$16 sm:%s1171]
  %vm1173 = vcmask 1043458
  %v1174 = vsel %vm1173, %v1172, %v1169
  %s1175 = scalar_lea.vmem %s0, 269
  %s1176 = smov 48
  %v1177 = vld [vmem:[%s1175] ss:$16 sm:%s1176]
  %vm1178 = vcmask 1045508
  %v1179 = vsel %vm1178, %v1177, %v1174
  %s1180 = scalar_lea.vmem %s0, 269
  %s1181 = smov 192
  %v1182 = vld [vmem:[%s1180] ss:$16 sm:%s1181]
  %vm1183 = vcmask 1047558
  %v1184 = vsel %vm1183, %v1182, %v1179
  %1185 = vrot.lane.b32.xlu0 %v1184, 32
  %v1186 = vpop.permute.xlu0 %1185
  %vm1187 = vcmask 523520
  %s1188 = scalar_lea.vmem %s1, 88
  %1189 = vst.msk [vmem:[%s1188] sm:$0xff] %vm1187, %v1186
  %s1190 = scalar_lea.vmem %s0, 397
  %s1191 = smov 3
  %v1192 = vld [vmem:[%s1190] ss:$16 sm:%s1191]
  %s1193 = scalar_lea.vmem %s0, 397
  %s1194 = smov 12
  %v1195 = vld [vmem:[%s1193] ss:$16 sm:%s1194]
  %vm1196 = vcmask 1043458
  %v1197 = vsel %vm1196, %v1195, %v1192
  %s1198 = scalar_lea.vmem %s0, 397
  %s1199 = smov 48
  %v1200 = vld [vmem:[%s1198] ss:$16 sm:%s1199]
  %vm1201 = vcmask 1045508
  %v1202 = vsel %vm1201, %v1200, %v1197
  %s1203 = scalar_lea.vmem %s0, 397
  %s1204 = smov 192
  %v1205 = vld [vmem:[%s1203] ss:$16 sm:%s1204]
  %vm1206 = vcmask 1047558
  %v1207 = vsel %vm1206, %v1205, %v1202
  %1208 = vrot.lane.b32.xlu0 %v1207, 32
  %v1209 = vpop.permute.xlu0 %1208
  %vm1210 = vcmask 523520
  %s1211 = scalar_lea.vmem %s1, 120
  %1212 = vst.msk [vmem:[%s1211] sm:$0xff] %vm1210, %v1209

// kernel: stable_diff_1d_forward.1
$region0: #{stable_diff_1d_forward.1}
  #allocation0 [shape = 'u32[]', space=smem, size = 0x4, offset = 0x4, fixed_abs, tag = 'smem constant byte address 0x4 - core index']
  #allocation1 [shape = 'u32[144,128]{1,0:T(1,128)}', space=vmem, size = 0x12000, scoped, tag = 'internal scratch']
  %s0 = inlined_call_operand.vmem [shape: f32[2,8], index: 0, kind: input, shape index: {}]
  %s1 = inlined_call_operand.vmem [shape: f32[2,64], index: 1, kind: input, shape index: {}]
  %s2 = inlined_call_operand.vmem [shape: f32[113,512], index: 2, kind: input, shape index: {}]
  %s3 = inlined_call_operand.vmem [shape: f32[513,64], index: 3, kind: input, shape index: {}]
  %s4 = inlined_call_operand.vmem [shape: f32[65,128], index: 4, kind: input, shape index: {}]
  %s5 = inlined_call_operand.hbm [shape: f32[2,128], index: 5, kind: output, shape index: {}]
  %s6 = sld [smem:[#allocation0]]
  $region30: #{stable_diff_1d_forward.1} parent=0
    _
  %s8 = ssub.s32 1, %s6
  %s9 = scalar_select 0, %s8, %s6
  $region1: #{stable_diff_1d_forward.1} parent=0
    #allocation2 [shape = 'u8[1024]{0}', space=vmem, size = 0x400, scoped, tag = 'output window, operand 0, single buffered']
    #allocation3 [shape = 's32[1]{0}', space=sflag, size = 0x4, scoped, tag = 'scoped memory for stable_diff_1d_forward.1']
    %10 = vsyncpa [#allocation3], 0
    // Predicated region
    $region2: #{stable_diff_1d_forward.1} parent=1 // pred_check
      _
    $region3: #{stable_diff_1d_forward.1} parent=1 // pred_check_branch
      %12 = sbr.rel (0) target = $region5
    $region4: #{stable_diff_1d_forward.1} parent=1 // pred_region
      _
    $region5: #{stable_diff_1d_forward.1} parent=1 // pred_fallthru
      _
    // Predicated region
    $region6: #{stable_diff_1d_forward.1} parent=1 // pred_check
      _
    $region7: #{stable_diff_1d_forward.1} parent=1 // pred_check_branch
      %14 = sbr.rel (0) target = $region9
    $region8: #{stable_diff_1d_forward.1} parent=1 // pred_region
      _
    $region9: #{stable_diff_1d_forward.1} parent=1 // pred_fallthru
      _
    // Predicated region
    $region10: #{stable_diff_1d_forward.1} parent=1 // pred_check
      _
    $region11: #{stable_diff_1d_forward.1} parent=1 // pred_check_branch
      %16 = sbr.rel (0) target = $region13
    $region12: #{stable_diff_1d_forward.1} parent=1 // pred_region
      _
    $region13: #{stable_diff_1d_forward.1} parent=1 // pred_fallthru
      _
    // Predicated region
    $region14: #{stable_diff_1d_forward.1} parent=1 // pred_check
      _
    $region15: #{stable_diff_1d_forward.1} parent=1 // pred_check_branch
      %18 = sbr.rel (0) target = $region17
    $region16: #{stable_diff_1d_forward.1} parent=1 // pred_region
      _
    $region17: #{stable_diff_1d_forward.1} parent=1 // pred_fallthru
      _
    // Predicated region
    $region18: #{stable_diff_1d_forward.1} parent=1 // pred_check
      _
    $region19: #{stable_diff_1d_forward.1} parent=1 // pred_check_branch
      %20 = sbr.rel (0) target = $region21
    $region20: #{stable_diff_1d_forward.1} parent=1 // pred_region
      _
    $region21: #{stable_diff_1d_forward.1} parent=1 // pred_fallthru
      _
    %v21 = vld [vmem:[%s2 + $0x1a0] sm:$0xff]
    %v22 = vld [vmem:[%s2 + $0x1c0] ss:$0 sm:$0xff]
    %v23 = vld [vmem:[%s0] sm:$0x3]
    %vm24 = vcmask 64512
    %v26 = vsel %vm24, %v23, 0
    %28 = vmatprep.subr.mxu0 0.0
    %29 = vmatpush1.msra.mxu0 %v21
    %30 = vmatprep.subr.mxu0 0.0
    %31 = vmatpush1.msra.mxu0 0.0
    %32 = vmatprep.subr.mxu0 0.0
    %33 = vmatpush1.msra.mxu0 0.0
    %34 = vmatprep.subr.mxu0 0.0
    %35 = vmatpush1.msra.mxu0 0.0
    %36 = vmatprep.subr.mxu0 0.0
    %37 = vmatpush1.msra.mxu0 0.0
    %38 = vmatprep.subr.mxu0 0.0
    %39 = vmatpush1.msra.mxu0 0.0
    %40 = vmatprep.subr.mxu0 0.0
    %41 = vmatpush1.msra.mxu0 0.0
    %42 = vmatprep.subr.mxu0 0.0
    %43 = vmatpush1.msra.mxu0 0.0
    %44 = vmatprep.subr.mxu0 0.0
    %45 = vmatpush1.msra.mxu0 0.0
    %46 = vmatprep.subr.mxu0 0.0
    %47 = vmatpush1.msra.mxu0 0.0
    %48 = vmatprep.subr.mxu0 0.0
    %49 = vmatpush1.msra.mxu0 0.0
    %50 = vmatprep.subr.mxu0 0.0
    %51 = vmatpush1.msra.mxu0 0.0
    %52 = vmatprep.subr.mxu0 0.0
    %53 = vmatpush1.msra.mxu0 0.0
    %54 = vmatprep.subr.mxu0 0.0
    %55 = vmatpush1.msra.mxu0 0.0
    %56 = vmatprep.subr.mxu0 0.0
    %57 = vmatpush1.msra.mxu0 0.0
    %58 = vmatprep.subr.mxu0 0.0
    %59 = vmatpush1.msra.mxu0 0.0
    %60 = vmatprep.subr.mxu0 0.0
    %61 = vmatpush1.msra.mxu0 0.0
    %62 = vmatprep.subr.mxu0 0.0
    %63 = vmatpush1.msra.mxu0 0.0
    %64 = vmatprep.subr.mxu0 0.0
    %65 = vmatpush1.msra.mxu0 0.0
    %66 = vmatprep.subr.mxu0 0.0
    %67 = vmatpush1.msra.mxu0 0.0
    %68 = vmatprep.subr.mxu0 0.0
    %69 = vmatpush1.msra.mxu0 0.0
    %70 = vmatprep.subr.mxu0 0.0
    %71 = vmatpush1.msra.mxu0 0.0
    %72 = vmatprep.subr.mxu0 0.0
    %73 = vmatpush1.msra.mxu0 0.0
    %74 = vmatprep.subr.mxu0 0.0
    %75 = vmatpush1.msra.mxu0 0.0
    %76 = vmatprep.subr.mxu0 0.0
    %77 = vmatpush1.msra.mxu0 0.0
    %78 = vmatprep.subr.mxu0 0.0
    %79 = vmatpush1.msra.mxu0 0.0
    %80 = vmatprep.subr.mxu0 0.0
    %81 = vmatpush1.msra.mxu0 0.0
    %82 = vmatprep.subr.mxu0 0.0
    %83 = vmatpush1.msra.mxu0 0.0
    %84 = vmatprep.subr.mxu0 0.0
    %85 = vmatpush1.msra.mxu0 0.0
    %86 = vmatprep.subr.mxu0 0.0
    %87 = vmatpush1.msra.mxu0 0.0
    %88 = vmatprep.subr.mxu0 0.0
    %89 = vmatpush1.msra.mxu0 0.0
    %90 = vmatprep.subr.mxu0 0.0
    %91 = vmatpush1.msra.mxu0 0.0
    %92 = vmatprep.mubr.f32.mxu0 0.0
    %93 = vmatmul.mubr.f32.gmra.mrb[0].mxu0 %v26
    %v94 = vpop.f32.mrb[0].mxu0
    %v95 = vadd.f32 %v22, %v94
    %v96 = vpop.f32.mrb[0].mxu0
    %97 = vdwg.mxu0
    %v98 = vmul.f32 %v95, %v95
    %vm99 = vcmask 254976
    %v100 = vsel %vm99, %v98, 0.0
    %101 = vadd.xlane.f32.xlu0 %v100
    %v102 = vpop.xlane.xlu0 %101
    %v103 = vadd.f32 %v102, 1e-12
    %v104 = vrsqrt.pop %v103
    %v105 = vmul.f32 %v95, %v104
    %v106 = vld [vmem:[%s2 + $0x100] sm:$0xff]
    %v107 = vld [vmem:[%s2 + $0x108] sm:$0xff]
    %v108 = vld [vmem:[%s2 + $0x110] sm:$0xff]
    %v109 = vld [vmem:[%s2 + $0x118] sm:$0xff]
    %v110 = vld [vmem:[%s2 + $0x120] sm:$0xff]
    %v111 = vld [vmem:[%s2 + $0x128] sm:$0xff]
    %v112 = vld [vmem:[%s2 + $0x130] sm:$0xff]
    %v113 = vld [vmem:[%s2 + $0x138] sm:$0xff]
    %v114 = vld [vmem:[%s2 + $0x140] sm:$0xff]
    %v115 = vld [vmem:[%s2 + $0x148] sm:$0xff]
    %v116 = vld [vmem:[%s2 + $0x150] sm:$0xff]
    %v117 = vld [vmem:[%s2 + $0x158] sm:$0xff]
    %v118 = vld [vmem:[%s2 + $0x160] sm:$0xff]
    %v119 = vld [vmem:[%s2 + $0x168] sm:$0xff]
    %v120 = vld [vmem:[%s2 + $0x170] sm:$0xff]
    %v121 = vld [vmem:[%s2 + $0x178] sm:$0xff]
    %vm122 = vcmask 261120
    %v124 = vsel %vm122, %v105, 0
    %126 = vmatprep.subr.mxu0 %v107
    %127 = vmatpush1.msra.mxu0 %v106
    %128 = vmatprep.subr.mxu0 %v111
    %129 = vmatpush1.msra.mxu0 %v110
    %130 = vmatprep.subr.mxu0 %v115
    %131 = vmatpush1.msra.mxu0 %v114
    %132 = vmatprep.subr.mxu0 %v119
    %133 = vmatpush1.msra.mxu0 %v118
    %134 = vmatprep.subr.mxu0 0.0
    %135 = vmatpush1.msra.mxu0 0.0
    %136 = vmatprep.subr.mxu0 0.0
    %137 = vmatpush1.msra.mxu0 0.0
    %138 = vmatprep.subr.mxu0 0.0
    %139 = vmatpush1.msra.mxu0 0.0
    %140 = vmatprep.subr.mxu0 0.0
    %141 = vmatpush1.msra.mxu0 0.0
    %142 = vmatprep.subr.mxu0 0.0
    %143 = vmatpush1.msra.mxu0 0.0
    %144 = vmatprep.subr.mxu0 0.0
    %145 = vmatpush1.msra.mxu0 0.0
    %146 = vmatprep.subr.mxu0 0.0
    %147 = vmatpush1.msra.mxu0 0.0
    %148 = vmatprep.subr.mxu0 0.0
    %149 = vmatpush1.msra.mxu0 0.0
    %150 = vmatprep.subr.mxu0 0.0
    %151 = vmatpush1.msra.mxu0 0.0
    %152 = vmatprep.subr.mxu0 0.0
    %153 = vmatpush1.msra.mxu0 0.0
    %154 = vmatprep.subr.mxu0 0.0
    %155 = vmatpush1.msra.mxu0 0.0
    %156 = vmatprep.subr.mxu0 0.0
    %157 = vmatpush1.msra.mxu0 0.0
    %158 = vmatprep.subr.mxu0 0.0
    %159 = vmatpush1.msra.mxu0 0.0
    %160 = vmatprep.subr.mxu0 0.0
    %161 = vmatpush1.msra.mxu0 0.0
    %162 = vmatprep.subr.mxu0 0.0
    %163 = vmatpush1.msra.mxu0 0.0
    %164 = vmatprep.subr.mxu0 0.0
    %165 = vmatpush1.msra.mxu0 0.0
    %166 = vmatprep.subr.mxu0 0.0
    %167 = vmatpush1.msra.mxu0 0.0
    %168 = vmatprep.subr.mxu0 0.0
    %169 = vmatpush1.msra.mxu0 0.0
    %170 = vmatprep.subr.mxu0 0.0
    %171 = vmatpush1.msra.mxu0 0.0
    %172 = vmatprep.subr.mxu0 0.0
    %173 = vmatpush1.msra.mxu0 0.0
    %174 = vmatprep.subr.mxu0 0.0
    %175 = vmatpush1.msra.mxu0 0.0
    %176 = vmatprep.subr.mxu0 0.0
    %177 = vmatpush1.msra.mxu0 0.0
    %178 = vmatprep.subr.mxu0 0.0
    %179 = vmatpush1.msra.mxu0 0.0
    %180 = vmatprep.subr.mxu0 0.0
    %181 = vmatpush1.msra.mxu0 0.0
    %182 = vmatprep.subr.mxu0 0.0
    %183 = vmatpush1.msra.mxu0 0.0
    %184 = vmatprep.subr.mxu0 0.0
    %185 = vmatpush1.msra.mxu0 0.0
    %186 = vmatprep.subr.mxu0 0.0
    %187 = vmatpush1.msra.mxu0 0.0
    %188 = vmatprep.subr.mxu0 0.0
    %189 = vmatpush1.msra.mxu0 0.0
    %190 = vmatprep.mubr.f32.mxu0 0.0
    %191 = vmatmul.mubr.f32.gmra.mrb[0].mxu0 %v124
    %v192 = vpop.f32.mrb[0].mxu0
    %v193 = vadd.f32 0.0, %v192
    %v194 = vpop.f32.mrb[0].mxu0
    %v195 = vadd.f32 0.0, %v194
    %196 = vdwg.mxu0
    %197 = vmatprep.subr.mxu0 %v109
    %198 = vmatpush1.msra.mxu0 %v108
    %199 = vmatprep.subr.mxu0 %v113
    %200 = vmatpush1.msra.mxu0 %v112
    %201 = vmatprep.subr.mxu0 %v117
    %202 = vmatpush1.msra.mxu0 %v116
    %203 = vmatprep.subr.mxu0 %v121
    %204 = vmatpush1.msra.mxu0 %v120
    %205 = vmatprep.subr.mxu0 0.0
    %206 = vmatpush1.msra.mxu0 0.0
    %207 = vmatprep.subr.mxu0 0.0
    %208 = vmatpush1.msra.mxu0 0.0
    %209 = vmatprep.subr.mxu0 0.0
    %210 = vmatpush1.msra.mxu0 0.0
    %211 = vmatprep.subr.mxu0 0.0
    %212 = vmatpush1.msra.mxu0 0.0
    %213 = vmatprep.subr.mxu0 0.0
    %214 = vmatpush1.msra.mxu0 0.0
    %215 = vmatprep.subr.mxu0 0.0
    %216 = vmatpush1.msra.mxu0 0.0
    %217 = vmatprep.subr.mxu0 0.0
    %218 = vmatpush1.msra.mxu0 0.0
    %219 = vmatprep.subr.mxu0 0.0
    %220 = vmatpush1.msra.mxu0 0.0
    %221 = vmatprep.subr.mxu0 0.0
    %222 = vmatpush1.msra.mxu0 0.0
    %223 = vmatprep.subr.mxu0 0.0
    %224 = vmatpush1.msra.mxu0 0.0
    %225 = vmatprep.subr.mxu0 0.0
    %226 = vmatpush1.msra.mxu0 0.0
    %227 = vmatprep.subr.mxu0 0.0
    %228 = vmatpush1.msra.mxu0 0.0
    %229 = vmatprep.subr.mxu0 0.0
    %230 = vmatpush1.msra.mxu0 0.0
    %231 = vmatprep.subr.mxu0 0.0
    %232 = vmatpush1.msra.mxu0 0.0
    %233 = vmatprep.subr.mxu0 0.0
    %234 = vmatpush1.msra.mxu0 0.0
    %235 = vmatprep.subr.mxu0 0.0
    %236 = vmatpush1.msra.mxu0 0.0
    %237 = vmatprep.subr.mxu0 0.0
    %238 = vmatpush1.msra.mxu0 0.0
    %239 = vmatprep.subr.mxu0 0.0
    %240 = vmatpush1.msra.mxu0 0.0
    %241 = vmatprep.subr.mxu0 0.0
    %242 = vmatpush1.msra.mxu0 0.0
    %243 = vmatprep.subr.mxu0 0.0
    %244 = vmatpush1.msra.mxu0 0.0
    %245 = vmatprep.subr.mxu0 0.0
    %246 = vmatpush1.msra.mxu0 0.0
    %247 = vmatprep.subr.mxu0 0.0
    %248 = vmatpush1.msra.mxu0 0.0
    %249 = vmatprep.subr.mxu0 0.0
    %250 = vmatpush1.msra.mxu0 0.0
    %251 = vmatprep.subr.mxu0 0.0
    %252 = vmatpush1.msra.mxu0 0.0
    %253 = vmatprep.subr.mxu0 0.0
    %254 = vmatpush1.msra.mxu0 0.0
    %255 = vmatprep.subr.mxu0 0.0
    %256 = vmatpush1.msra.mxu0 0.0
    %257 = vmatprep.subr.mxu0 0.0
    %258 = vmatpush1.msra.mxu0 0.0
    %259 = vmatprep.subr.mxu0 0.0
    %260 = vmatpush1.msra.mxu0 0.0
    %261 = vmatprep.mubr.f32.mxu0 0.0
    %262 = vmatmul.mubr.f32.gmra.mrb[0].mxu0 %v124
    %v263 = vpop.f32.mrb[0].mxu0
    %v264 = vadd.f32 0.0, %v263
    %v265 = vpop.f32.mrb[0].mxu0
    %v266 = vadd.f32 0.0, %v265
    %267 = vdwg.mxu0
    %v268 = vld [vmem:[%s2] sm:$0xff]
    %v269 = vld [vmem:[%s2 + $0x8] sm:$0xff]
    %v270 = vld [vmem:[%s2 + $0x10] sm:$0xff]
    %v271 = vld [vmem:[%s2 + $0x18] sm:$0xff]
    %v272 = vld [vmem:[%s2 + $0x20] sm:$0xff]
    %v273 = vld [vmem:[%s2 + $0x28] sm:$0xff]
    %v274 = vld [vmem:[%s2 + $0x30] sm:$0xff]
    %v275 = vld [vmem:[%s2 + $0x38] sm:$0xff]
    %v276 = vld [vmem:[%s2 + $0x40] sm:$0xff]
    %v277 = vld [vmem:[%s2 + $0x48] sm:$0xff]
    %v278 = vld [vmem:[%s2 + $0x50] sm:$0xff]
    %v279 = vld [vmem:[%s2 + $0x58] sm:$0xff]
    %v280 = vld [vmem:[%s2 + $0x60] sm:$0xff]
    %v281 = vld [vmem:[%s2 + $0x68] sm:$0xff]
    %v282 = vld [vmem:[%s2 + $0x70] sm:$0xff]
    %v283 = vld [vmem:[%s2 + $0x78] sm:$0xff]
    %v284 = vld [vmem:[%s2 + $0x80] sm:$0xff]
    %v285 = vld [vmem:[%s2 + $0x88] sm:$0xff]
    %v286 = vld [vmem:[%s2 + $0x90] sm:$0xff]
    %v287 = vld [vmem:[%s2 + $0x98] sm:$0xff]
    %v288 = vld [vmem:[%s2 + $0xa0] sm:$0xff]
    %v289 = vld [vmem:[%s2 + $0xa8] sm:$0xff]
    %v290 = vld [vmem:[%s2 + $0xb0] sm:$0xff]
    %v291 = vld [vmem:[%s2 + $0xb8] sm:$0xff]
    %v292 = vld [vmem:[%s2 + $0xc0] sm:$0xff]
    %v293 = vld [vmem:[%s2 + $0xc8] sm:$0xff]
    %v294 = vld [vmem:[%s2 + $0xd0] sm:$0xff]
    %v295 = vld [vmem:[%s2 + $0xd8] sm:$0xff]
    %v296 = vld [vmem:[%s2 + $0xe0] sm:$0xff]
    %v297 = vld [vmem:[%s2 + $0xe8] sm:$0xff]
    %v298 = vld [vmem:[%s2 + $0xf0] sm:$0xff]
    %v299 = vld [vmem:[%s2 + $0xf8] sm:$0xff]
    %v300 = vld [vmem:[%s3] sm:$0xff]
    %v301 = vld [vmem:[%s3 + $0x8] sm:$0xff]
    %v302 = vld [vmem:[%s3 + $0x10] sm:$0xff]
    %v303 = vld [vmem:[%s3 + $0x18] sm:$0xff]
    %v304 = vld [vmem:[%s3 + $0x20] sm:$0xff]
    %v305 = vld [vmem:[%s3 + $0x28] sm:$0xff]
    %v306 = vld [vmem:[%s3 + $0x30] sm:$0xff]
    %v307 = vld [vmem:[%s3 + $0x38] sm:$0xff]
    %v308 = vld [vmem:[%s3 + $0x40] sm:$0xff]
    %v309 = vld [vmem:[%s3 + $0x48] sm:$0xff]
    %v310 = vld [vmem:[%s3 + $0x50] sm:$0xff]
    %v311 = vld [vmem:[%s3 + $0x58] sm:$0xff]
    %v312 = vld [vmem:[%s3 + $0x60] sm:$0xff]
    %v313 = vld [vmem:[%s3 + $0x68] sm:$0xff]
    %v314 = vld [vmem:[%s3 + $0x70] sm:$0xff]
    %v315 = vld [vmem:[%s3 + $0x78] sm:$0xff]
    %v316 = vld [vmem:[%s3 + $0x80] sm:$0xff]
    %v317 = vld [vmem:[%s3 + $0x88] sm:$0xff]
    %v318 = vld [vmem:[%s3 + $0x90] sm:$0xff]
    %v319 = vld [vmem:[%s3 + $0x98] sm:$0xff]
    %v320 = vld [vmem:[%s3 + $0xa0] sm:$0xff]
    %v321 = vld [vmem:[%s3 + $0xa8] sm:$0xff]
    %v322 = vld [vmem:[%s3 + $0xb0] sm:$0xff]
    %v323 = vld [vmem:[%s3 + $0xb8] sm:$0xff]
    %v324 = vld [vmem:[%s3 + $0xc0] sm:$0xff]
    %v325 = vld [vmem:[%s3 + $0xc8] sm:$0xff]
    %v326 = vld [vmem:[%s3 + $0xd0] sm:$0xff]
    %v327 = vld [vmem:[%s3 + $0xd8] sm:$0xff]
    %v328 = vld [vmem:[%s3 + $0xe0] sm:$0xff]
    %v329 = vld [vmem:[%s3 + $0xe8] sm:$0xff]
    %v330 = vld [vmem:[%s3 + $0xf0] sm:$0xff]
    %v331 = vld [vmem:[%s3 + $0xf8] sm:$0xff]
    %v332 = vld [vmem:[%s3 + $0x100] sm:$0xff]
    %v333 = vld [vmem:[%s3 + $0x108] sm:$0xff]
    %v334 = vld [vmem:[%s3 + $0x110] sm:$0xff]
    %v335 = vld [vmem:[%s3 + $0x118] sm:$0xff]
    %v336 = vld [vmem:[%s3 + $0x120] sm:$0xff]
    %v337 = vld [vmem:[%s3 + $0x128] sm:$0xff]
    %v338 = vld [vmem:[%s3 + $0x130] sm:$0xff]
    %v339 = vld [vmem:[%s3 + $0x138] sm:$0xff]
    %v340 = vld [vmem:[%s3 + $0x140] sm:$0xff]
    %v341 = vld [vmem:[%s3 + $0x148] sm:$0xff]
    %v342 = vld [vmem:[%s3 + $0x150] sm:$0xff]
    %v343 = vld [vmem:[%s3 + $0x158] sm:$0xff]
    %v344 = vld [vmem:[%s3 + $0x160] sm:$0xff]
    %v345 = vld [vmem:[%s3 + $0x168] sm:$0xff]
    %v346 = vld [vmem:[%s3 + $0x170] sm:$0xff]
    %v347 = vld [vmem:[%s3 + $0x178] sm:$0xff]
    %v348 = vld [vmem:[%s3 + $0x180] sm:$0xff]
    %v349 = vld [vmem:[%s3 + $0x188] sm:$0xff]
    %v350 = vld [vmem:[%s3 + $0x190] sm:$0xff]
    %v351 = vld [vmem:[%s3 + $0x198] sm:$0xff]
    %v352 = vld [vmem:[%s3 + $0x1a0] sm:$0xff]
    %v353 = vld [vmem:[%s3 + $0x1a8] sm:$0xff]
    %v354 = vld [vmem:[%s3 + $0x1b0] sm:$0xff]
    %v355 = vld [vmem:[%s3 + $0x1b8] sm:$0xff]
    %v356 = vld [vmem:[%s3 + $0x1c0] sm:$0xff]
    %v357 = vld [vmem:[%s3 + $0x1c8] sm:$0xff]
    %v358 = vld [vmem:[%s3 + $0x1d0] sm:$0xff]
    %v359 = vld [vmem:[%s3 + $0x1d8] sm:$0xff]
    %v360 = vld [vmem:[%s3 + $0x1e0] sm:$0xff]
    %v361 = vld [vmem:[%s3 + $0x1e8] sm:$0xff]
    %v362 = vld [vmem:[%s3 + $0x1f0] sm:$0xff]
    %v363 = vld [vmem:[%s3 + $0x1f8] sm:$0xff]
    %v364 = vld [vmem:[%s3 + $0x200] sm:$0x1]
    %v365 = vld [vmem:[%s1] sm:$0x3]
    %v366 = vld [vmem:[%s2 + $0x180] sm:$0x3]
    %v367 = vld [vmem:[%s2 + $0x188] sm:$0x3]
    %v368 = vld [vmem:[%s2 + $0x190] sm:$0x3]
    %v369 = vld [vmem:[%s2 + $0x198] sm:$0x3]
    %vm370 = vcmask 523264
    %v372 = vsel %vm370, %v365, 0
    %374 = vmatprep.subr.mxu0 %v269
    %375 = vmatpush1.msra.mxu0 %v268
    %376 = vmatprep.subr.mxu0 %v273
    %377 = vmatpush1.msra.mxu0 %v272
    %378 = vmatprep.subr.mxu0 %v277
    %379 = vmatpush1.msra.mxu0 %v276
    %380 = vmatprep.subr.mxu0 %v281
    %381 = vmatpush1.msra.mxu0 %v280
    %382 = vmatprep.subr.mxu0 %v285
    %383 = vmatpush1.msra.mxu0 %v284
    %384 = vmatprep.subr.mxu0 %v289
    %385 = vmatpush1.msra.mxu0 %v288
    %386 = vmatprep.subr.mxu0 %v293
    %387 = vmatpush1.msra.mxu0 %v292
    %388 = vmatprep.subr.mxu0 %v297
    %389 = vmatpush1.msra.mxu0 %v296
    %390 = vmatprep.subr.mxu0 0.0
    %391 = vmatpush1.msra.mxu0 0.0
    %392 = vmatprep.subr.mxu0 0.0
    %393 = vmatpush1.msra.mxu0 0.0
    %394 = vmatprep.subr.mxu0 0.0
    %395 = vmatpush1.msra.mxu0 0.0
    %396 = vmatprep.subr.mxu0 0.0
    %397 = vmatpush1.msra.mxu0 0.0
    %398 = vmatprep.subr.mxu0 0.0
    %399 = vmatpush1.msra.mxu0 0.0
    %400 = vmatprep.subr.mxu0 0.0
    %401 = vmatpush1.msra.mxu0 0.0
    %402 = vmatprep.subr.mxu0 0.0
    %403 = vmatpush1.msra.mxu0 0.0
    %404 = vmatprep.subr.mxu0 0.0
    %405 = vmatpush1.msra.mxu0 0.0
    %406 = vmatprep.subr.mxu0 0.0
    %407 = vmatpush1.msra.mxu0 0.0
    %408 = vmatprep.subr.mxu0 0.0
    %409 = vmatpush1.msra.mxu0 0.0
    %410 = vmatprep.subr.mxu0 0.0
    %411 = vmatpush1.msra.mxu0 0.0
    %412 = vmatprep.subr.mxu0 0.0
    %413 = vmatpush1.msra.mxu0 0.0
    %414 = vmatprep.subr.mxu0 0.0
    %415 = vmatpush1.msra.mxu0 0.0
    %416 = vmatprep.subr.mxu0 0.0
    %417 = vmatpush1.msra.mxu0 0.0
    %418 = vmatprep.subr.mxu0 0.0
    %419 = vmatpush1.msra.mxu0 0.0
    %420 = vmatprep.subr.mxu0 0.0
    %421 = vmatpush1.msra.mxu0 0.0
    %422 = vmatprep.subr.mxu0 0.0
    %423 = vmatpush1.msra.mxu0 0.0
    %424 = vmatprep.subr.mxu0 0.0
    %425 = vmatpush1.msra.mxu0 0.0
    %426 = vmatprep.subr.mxu0 0.0
    %427 = vmatpush1.msra.mxu0 0.0
    %428 = vmatprep.subr.mxu0 0.0
    %429 = vmatpush1.msra.mxu0 0.0
    %430 = vmatprep.subr.mxu0 0.0
    %431 = vmatpush1.msra.mxu0 0.0
    %432 = vmatprep.subr.mxu0 0.0
    %433 = vmatpush1.msra.mxu0 0.0
    %434 = vmatprep.subr.mxu0 0.0
    %435 = vmatpush1.msra.mxu0 0.0
    %436 = vmatprep.subr.mxu0 0.0
    %437 = vmatpush1.msra.mxu0 0.0
    %438 = vmatprep.mubr.f32.mxu0 0.0
    %439 = vmatmul.mubr.f32.gmra.mrb[0].mxu0 %v372
    %v440 = vpop.f32.mrb[0].mxu0
    %v441 = vadd.f32 %v366, %v440
    %v442 = vpop.f32.mrb[0].mxu0
    %v443 = vadd.f32 %v367, %v442
    %444 = vdwg.mxu0
    %445 = vmatprep.subr.mxu0 %v271
    %446 = vmatpush1.msra.mxu0 %v270
    %447 = vmatprep.subr.mxu0 %v275
    %448 = vmatpush1.msra.mxu0 %v274
    %449 = vmatprep.subr.mxu0 %v279
    %450 = vmatpush1.msra.mxu0 %v278
    %451 = vmatprep.subr.mxu0 %v283
    %452 = vmatpush1.msra.mxu0 %v282
    %453 = vmatprep.subr.mxu0 %v287
    %454 = vmatpush1.msra.mxu0 %v286
    %455 = vmatprep.subr.mxu0 %v291
    %456 = vmatpush1.msra.mxu0 %v290
    %457 = vmatprep.subr.mxu0 %v295
    %458 = vmatpush1.msra.mxu0 %v294
    %459 = vmatprep.subr.mxu0 %v299
    %460 = vmatpush1.msra.mxu0 %v298
    %461 = vmatprep.subr.mxu0 0.0
    %462 = vmatpush1.msra.mxu0 0.0
    %463 = vmatprep.subr.mxu0 0.0
    %464 = vmatpush1.msra.mxu0 0.0
    %465 = vmatprep.subr.mxu0 0.0
    %466 = vmatpush1.msra.mxu0 0.0
    %467 = vmatprep.subr.mxu0 0.0
    %468 = vmatpush1.msra.mxu0 0.0
    %469 = vmatprep.subr.mxu0 0.0
    %470 = vmatpush1.msra.mxu0 0.0
    %471 = vmatprep.subr.mxu0 0.0
    %472 = vmatpush1.msra.mxu0 0.0
    %473 = vmatprep.subr.mxu0 0.0
    %474 = vmatpush1.msra.mxu0 0.0
    %475 = vmatprep.subr.mxu0 0.0
    %476 = vmatpush1.msra.mxu0 0.0
    %477 = vmatprep.subr.mxu0 0.0
    %478 = vmatpush1.msra.mxu0 0.0
    %479 = vmatprep.subr.mxu0 0.0
    %480 = vmatpush1.msra.mxu0 0.0
    %481 = vmatprep.subr.mxu0 0.0
    %482 = vmatpush1.msra.mxu0 0.0
    %483 = vmatprep.subr.mxu0 0.0
    %484 = vmatpush1.msra.mxu0 0.0
    %485 = vmatprep.subr.mxu0 0.0
    %486 = vmatpush1.msra.mxu0 0.0
    %487 = vmatprep.subr.mxu0 0.0
    %488 = vmatpush1.msra.mxu0 0.0
    %489 = vmatprep.subr.mxu0 0.0
    %490 = vmatpush1.msra.mxu0 0.0
    %491 = vmatprep.subr.mxu0 0.0
    %492 = vmatpush1.msra.mxu0 0.0
    %493 = vmatprep.subr.mxu0 0.0
    %494 = vmatpush1.msra.mxu0 0.0
    %495 = vmatprep.subr.mxu0 0.0
    %496 = vmatpush1.msra.mxu0 0.0
    %497 = vmatprep.subr.mxu0 0.0
    %498 = vmatpush1.msra.mxu0 0.0
    %499 = vmatprep.subr.mxu0 0.0
    %500 = vmatpush1.msra.mxu0 0.0
    %501 = vmatprep.subr.mxu0 0.0
    %502 = vmatpush1.msra.mxu0 0.0
    %503 = vmatprep.subr.mxu0 0.0
    %504 = vmatpush1.msra.mxu0 0.0
    %505 = vmatprep.subr.mxu0 0.0
    %506 = vmatpush1.msra.mxu0 0.0
    %507 = vmatprep.subr.mxu0 0.0
    %508 = vmatpush1.msra.mxu0 0.0
    %509 = vmatprep.mubr.f32.mxu0 0.0
    %510 = vmatmul.mubr.f32.gmra.mrb[0].mxu0 %v372
    %v511 = vpop.f32.mrb[0].mxu0
    %v512 = vadd.f32 %v368, %v511
    %v513 = vpop.f32.mrb[0].mxu0
    %v514 = vadd.f32 %v369, %v513
    %515 = vdwg.mxu0
    %v516 = vadd.f32 %v441, %v193
    %v517 = vadd.f32 %v443, %v195
    %v518 = vadd.f32 %v512, %v264
    %v519 = vadd.f32 %v514, %v266
    %v520 = vxor.u32 %v516, 2147483648
    %v521 = vxor.u32 %v517, 2147483648
    %v522 = vxor.u32 %v518, 2147483648
    %v523 = vxor.u32 %v519, 2147483648
    %v524 = vmul.f32 %v520, 1.442695
    %v525 = vpow.pop %v524
    %v526 = vmul.f32 %v521, 1.442695
    %v527 = vpow.pop %v526
    %v528 = vmul.f32 %v522, 1.442695
    %v529 = vpow.pop %v528
    %v530 = vmul.f32 %v523, 1.442695
    %v531 = vpow.pop %v530
    %v532 = vadd.f32 %v525, 1.0
    %v533 = vadd.f32 %v527, 1.0
    %v534 = vadd.f32 %v529, 1.0
    %v535 = vadd.f32 %v531, 1.0
    %v536 = vrcp.pop %v532
    %v537 = vmul.f32 1.0, %v536
    %v538 = vrcp.pop %v533
    %v539 = vmul.f32 1.0, %v538
    %v540 = vrcp.pop %v534
    %v541 = vmul.f32 1.0, %v540
    %v542 = vrcp.pop %v535
    %v543 = vmul.f32 1.0, %v542
    %v544 = vmul.f32 %v516, %v537
    %v545 = vmul.f32 %v517, %v539
    %v546 = vmul.f32 %v518, %v541
    %v547 = vmul.f32 %v519, %v543
    %v548 = vlaneseq
    %v549 = vshrl.u32 %v548, 7
    %v550 = vsub.s32 0, %v549
    %v551 = vrot.slane %v364, %v550
    %552 = vmatprep.subr.mxu0 0.0
    %553 = vmatpush1.msra.mxu0 %v300
    %554 = vmatprep.subr.mxu0 0.0
    %555 = vmatpush1.msra.mxu0 %v301
    %556 = vmatprep.subr.mxu0 0.0
    %557 = vmatpush1.msra.mxu0 %v302
    %558 = vmatprep.subr.mxu0 0.0
    %559 = vmatpush1.msra.mxu0 %v303
    %560 = vmatprep.subr.mxu0 0.0
    %561 = vmatpush1.msra.mxu0 %v304
    %562 = vmatprep.subr.mxu0 0.0
    %563 = vmatpush1.msra.mxu0 %v305
    %564 = vmatprep.subr.mxu0 0.0
    %565 = vmatpush1.msra.mxu0 %v306
    %566 = vmatprep.subr.mxu0 0.0
    %567 = vmatpush1.msra.mxu0 %v307
    %568 = vmatprep.subr.mxu0 0.0
    %569 = vmatpush1.msra.mxu0 %v308
    %570 = vmatprep.subr.mxu0 0.0
    %571 = vmatpush1.msra.mxu0 %v309
    %572 = vmatprep.subr.mxu0 0.0
    %573 = vmatpush1.msra.mxu0 %v310
    %574 = vmatprep.subr.mxu0 0.0
    %575 = vmatpush1.msra.mxu0 %v311
    %576 = vmatprep.subr.mxu0 0.0
    %577 = vmatpush1.msra.mxu0 %v312
    %578 = vmatprep.subr.mxu0 0.0
    %579 = vmatpush1.msra.mxu0 %v313
    %580 = vmatprep.subr.mxu0 0.0
    %581 = vmatpush1.msra.mxu0 %v314
    %582 = vmatprep.subr.mxu0 0.0
    %583 = vmatpush1.msra.mxu0 %v315
    %584 = vmatprep.subr.mxu0 0.0
    %585 = vmatpush1.msra.mxu0 %v316
    %586 = vmatprep.subr.mxu0 0.0
    %587 = vmatpush1.msra.mxu0 %v317
    %588 = vmatprep.subr.mxu0 0.0
    %589 = vmatpush1.msra.mxu0 %v318
    %590 = vmatprep.subr.mxu0 0.0
    %591 = vmatpush1.msra.mxu0 %v319
    %592 = vmatprep.subr.mxu0 0.0
    %593 = vmatpush1.msra.mxu0 %v320
    %594 = vmatprep.subr.mxu0 0.0
    %595 = vmatpush1.msra.mxu0 %v321
    %596 = vmatprep.subr.mxu0 0.0
    %597 = vmatpush1.msra.mxu0 %v322
    %598 = vmatprep.subr.mxu0 0.0
    %599 = vmatpush1.msra.mxu0 %v323
    %600 = vmatprep.subr.mxu0 0.0
    %601 = vmatpush1.msra.mxu0 %v324
    %602 = vmatprep.subr.mxu0 0.0
    %603 = vmatpush1.msra.mxu0 %v325
    %604 = vmatprep.subr.mxu0 0.0
    %605 = vmatpush1.msra.mxu0 %v326
    %606 = vmatprep.subr.mxu0 0.0
    %607 = vmatpush1.msra.mxu0 %v327
    %608 = vmatprep.subr.mxu0 0.0
    %609 = vmatpush1.msra.mxu0 %v328
    %610 = vmatprep.subr.mxu0 0.0
    %611 = vmatpush1.msra.mxu0 %v329
    %612 = vmatprep.subr.mxu0 0.0
    %613 = vmatpush1.msra.mxu0 %v330
    %614 = vmatprep.subr.mxu0 0.0
    %615 = vmatpush1.msra.mxu0 %v331
    %616 = vmatprep.mubr.f32.mxu0 %v545
    %617 = vmatmul.mubr.f32.gmra.mrb[0].mxu0 %v544
    %v618 = vpop.f32.mrb[0].mxu0
    %v619 = vadd.f32 %v551, %v618
    %v620 = vpop.f32.mrb[0].mxu0
    %621 = vdwg.mxu0
    %622 = vmatprep.subr.mxu0 0.0
    %623 = vmatpush1.msra.mxu0 %v332
    %624 = vmatprep.subr.mxu0 0.0
    %625 = vmatpush1.msra.mxu0 %v333
    %626 = vmatprep.subr.mxu0 0.0
    %627 = vmatpush1.msra.mxu0 %v334
    %628 = vmatprep.subr.mxu0 0.0
    %629 = vmatpush1.msra.mxu0 %v335
    %630 = vmatprep.subr.mxu0 0.0
    %631 = vmatpush1.msra.mxu0 %v336
    %632 = vmatprep.subr.mxu0 0.0
    %633 = vmatpush1.msra.mxu0 %v337
    %634 = vmatprep.subr.mxu0 0.0
    %635 = vmatpush1.msra.mxu0 %v338
    %636 = vmatprep.subr.mxu0 0.0
    %637 = vmatpush1.msra.mxu0 %v339
    %638 = vmatprep.subr.mxu0 0.0
    %639 = vmatpush1.msra.mxu0 %v340
    %640 = vmatprep.subr.mxu0 0.0
    %641 = vmatpush1.msra.mxu0 %v341
    %642 = vmatprep.subr.mxu0 0.0
    %643 = vmatpush1.msra.mxu0 %v342
    %644 = vmatprep.subr.mxu0 0.0
    %645 = vmatpush1.msra.mxu0 %v343
    %646 = vmatprep.subr.mxu0 0.0
    %647 = vmatpush1.msra.mxu0 %v344
    %648 = vmatprep.subr.mxu0 0.0
    %649 = vmatpush1.msra.mxu0 %v345
    %650 = vmatprep.subr.mxu0 0.0
    %651 = vmatpush1.msra.mxu0 %v346
    %652 = vmatprep.subr.mxu0 0.0
    %653 = vmatpush1.msra.mxu0 %v347
    %654 = vmatprep.subr.mxu0 0.0
    %655 = vmatpush1.msra.mxu0 %v348
    %656 = vmatprep.subr.mxu0 0.0
    %657 = vmatpush1.msra.mxu0 %v349
    %658 = vmatprep.subr.mxu0 0.0
    %659 = vmatpush1.msra.mxu0 %v350
    %660 = vmatprep.subr.mxu0 0.0
    %661 = vmatpush1.msra.mxu0 %v351
    %662 = vmatprep.subr.mxu0 0.0
    %663 = vmatpush1.msra.mxu0 %v352
    %664 = vmatprep.subr.mxu0 0.0
    %665 = vmatpush1.msra.mxu0 %v353
    %666 = vmatprep.subr.mxu0 0.0
    %667 = vmatpush1.msra.mxu0 %v354
    %668 = vmatprep.subr.mxu0 0.0
    %669 = vmatpush1.msra.mxu0 %v355
    %670 = vmatprep.subr.mxu0 0.0
    %671 = vmatpush1.msra.mxu0 %v356
    %672 = vmatprep.subr.mxu0 0.0
    %673 = vmatpush1.msra.mxu0 %v357
    %674 = vmatprep.subr.mxu0 0.0
    %675 = vmatpush1.msra.mxu0 %v358
    %676 = vmatprep.subr.mxu0 0.0
    %677 = vmatpush1.msra.mxu0 %v359
    %678 = vmatprep.subr.mxu0 0.0
    %679 = vmatpush1.msra.mxu0 %v360
    %680 = vmatprep.subr.mxu0 0.0
    %681 = vmatpush1.msra.mxu0 %v361
    %682 = vmatprep.subr.mxu0 0.0
    %683 = vmatpush1.msra.mxu0 %v362
    %684 = vmatprep.subr.mxu0 0.0
    %685 = vmatpush1.msra.mxu0 %v363
    %686 = vmatprep.mubr.f32.mxu0 %v547
    %687 = vmatmul.mubr.f32.gmra.mrb[0].mxu0 %v546
    %v688 = vpop.f32.mrb[0].mxu0
    %v689 = vadd.f32 %v619, %v688
    %v690 = vpop.f32.mrb[0].mxu0
    %691 = vdwg.mxu0
    %v692 = vsub.f32 %v365, %v689
    %v693 = vld [vmem:[%s2 + $0x180] sm:$0xc]
    %v694 = vld [vmem:[%s2 + $0x188] sm:$0xc]
    %v695 = vld [vmem:[%s2 + $0x190] sm:$0xc]
    %v696 = vld [vmem:[%s2 + $0x198] sm:$0xc]
    %v701 = vrot.slane %v693, 2
    %v702 = vrot.slane %v694, 2
    %v703 = vrot.slane %v695, 2
    %v704 = vrot.slane %v696, 2
    %v710 = vsel %vm370, %v692, 0
    %712 = vmatprep.subr.mxu0 %v269
    %713 = vmatpush1.msra.mxu0 %v268
    %714 = vmatprep.subr.mxu0 %v273
    %715 = vmatpush1.msra.mxu0 %v272
    %716 = vmatprep.subr.mxu0 %v277
    %717 = vmatpush1.msra.mxu0 %v276
    %718 = vmatprep.subr.mxu0 %v281
    %719 = vmatpush1.msra.mxu0 %v280
    %720 = vmatprep.subr.mxu0 %v285
    %721 = vmatpush1.msra.mxu0 %v284
    %722 = vmatprep.subr.mxu0 %v289
    %723 = vmatpush1.msra.mxu0 %v288
    %724 = vmatprep.subr.mxu0 %v293
    %725 = vmatpush1.msra.mxu0 %v292
    %726 = vmatprep.subr.mxu0 %v297
    %727 = vmatpush1.msra.mxu0 %v296
    %728 = vmatprep.subr.mxu0 0.0
    %729 = vmatpush1.msra.mxu0 0.0
    %730 = vmatprep.subr.mxu0 0.0
    %731 = vmatpush1.msra.mxu0 0.0
    %732 = vmatprep.subr.mxu0 0.0
    %733 = vmatpush1.msra.mxu0 0.0
    %734 = vmatprep.subr.mxu0 0.0
    %735 = vmatpush1.msra.mxu0 0.0
    %736 = vmatprep.subr.mxu0 0.0
    %737 = vmatpush1.msra.mxu0 0.0
    %738 = vmatprep.subr.mxu0 0.0
    %739 = vmatpush1.msra.mxu0 0.0
    %740 = vmatprep.subr.mxu0 0.0
    %741 = vmatpush1.msra.mxu0 0.0
    %742 = vmatprep.subr.mxu0 0.0
    %743 = vmatpush1.msra.mxu0 0.0
    %744 = vmatprep.subr.mxu0 0.0
    %745 = vmatpush1.msra.mxu0 0.0
    %746 = vmatprep.subr.mxu0 0.0
    %747 = vmatpush1.msra.mxu0 0.0
    %748 = vmatprep.subr.mxu0 0.0
    %749 = vmatpush1.msra.mxu0 0.0
    %750 = vmatprep.subr.mxu0 0.0
    %751 = vmatpush1.msra.mxu0 0.0
    %752 = vmatprep.subr.mxu0 0.0
    %753 = vmatpush1.msra.mxu0 0.0
    %754 = vmatprep.subr.mxu0 0.0
    %755 = vmatpush1.msra.mxu0 0.0
    %756 = vmatprep.subr.mxu0 0.0
    %757 = vmatpush1.msra.mxu0 0.0
    %758 = vmatprep.subr.mxu0 0.0
    %759 = vmatpush1.msra.mxu0 0.0
    %760 = vmatprep.subr.mxu0 0.0
    %761 = vmatpush1.msra.mxu0 0.0
    %762 = vmatprep.subr.mxu0 0.0
    %763 = vmatpush1.msra.mxu0 0.0
    %764 = vmatprep.subr.mxu0 0.0
    %765 = vmatpush1.msra.mxu0 0.0
    %766 = vmatprep.subr.mxu0 0.0
    %767 = vmatpush1.msra.mxu0 0.0
    %768 = vmatprep.subr.mxu0 0.0
    %769 = vmatpush1.msra.mxu0 0.0
    %770 = vmatprep.subr.mxu0 0.0
    %771 = vmatpush1.msra.mxu0 0.0
    %772 = vmatprep.subr.mxu0 0.0
    %773 = vmatpush1.msra.mxu0 0.0
    %774 = vmatprep.subr.mxu0 0.0
    %775 = vmatpush1.msra.mxu0 0.0
    %776 = vmatprep.mubr.f32.mxu0 0.0
    %777 = vmatmul.mubr.f32.gmra.mrb[0].mxu0 %v710
    %v778 = vpop.f32.mrb[0].mxu0
    %v779 = vadd.f32 %v701, %v778
    %v780 = vpop.f32.mrb[0].mxu0
    %v781 = vadd.f32 %v702, %v780
    %782 = vdwg.mxu0
    %783 = vmatprep.subr.mxu0 %v271
    %784 = vmatpush1.msra.mxu0 %v270
    %785 = vmatprep.subr.mxu0 %v275
    %786 = vmatpush1.msra.mxu0 %v274
    %787 = vmatprep.subr.mxu0 %v279
    %788 = vmatpush1.msra.mxu0 %v278
    %789 = vmatprep.subr.mxu0 %v283
    %790 = vmatpush1.msra.mxu0 %v282
    %791 = vmatprep.subr.mxu0 %v287
    %792 = vmatpush1.msra.mxu0 %v286
    %793 = vmatprep.subr.mxu0 %v291
    %794 = vmatpush1.msra.mxu0 %v290
    %795 = vmatprep.subr.mxu0 %v295
    %796 = vmatpush1.msra.mxu0 %v294
    %797 = vmatprep.subr.mxu0 %v299
    %798 = vmatpush1.msra.mxu0 %v298
    %799 = vmatprep.subr.mxu0 0.0
    %800 = vmatpush1.msra.mxu0 0.0
    %801 = vmatprep.subr.mxu0 0.0
    %802 = vmatpush1.msra.mxu0 0.0
    %803 = vmatprep.subr.mxu0 0.0
    %804 = vmatpush1.msra.mxu0 0.0
    %805 = vmatprep.subr.mxu0 0.0
    %806 = vmatpush1.msra.mxu0 0.0
    %807 = vmatprep.subr.mxu0 0.0
    %808 = vmatpush1.msra.mxu0 0.0
    %809 = vmatprep.subr.mxu0 0.0
    %810 = vmatpush1.msra.mxu0 0.0
    %811 = vmatprep.subr.mxu0 0.0
    %812 = vmatpush1.msra.mxu0 0.0
    %813 = vmatprep.subr.mxu0 0.0
    %814 = vmatpush1.msra.mxu0 0.0
    %815 = vmatprep.subr.mxu0 0.0
    %816 = vmatpush1.msra.mxu0 0.0
    %817 = vmatprep.subr.mxu0 0.0
    %818 = vmatpush1.msra.mxu0 0.0
    %819 = vmatprep.subr.mxu0 0.0
    %820 = vmatpush1.msra.mxu0 0.0
    %821 = vmatprep.subr.mxu0 0.0
    %822 = vmatpush1.msra.mxu0 0.0
    %823 = vmatprep.subr.mxu0 0.0
    %824 = vmatpush1.msra.mxu0 0.0
    %825 = vmatprep.subr.mxu0 0.0
    %826 = vmatpush1.msra.mxu0 0.0
    %827 = vmatprep.subr.mxu0 0.0
    %828 = vmatpush1.msra.mxu0 0.0
    %829 = vmatprep.subr.mxu0 0.0
    %830 = vmatpush1.msra.mxu0 0.0
    %831 = vmatprep.subr.mxu0 0.0
    %832 = vmatpush1.msra.mxu0 0.0
    %833 = vmatprep.subr.mxu0 0.0
    %834 = vmatpush1.msra.mxu0 0.0
    %835 = vmatprep.subr.mxu0 0.0
    %836 = vmatpush1.msra.mxu0 0.0
    %837 = vmatprep.subr.mxu0 0.0
    %838 = vmatpush1.msra.mxu0 0.0
    %839 = vmatprep.subr.mxu0 0.0
    %840 = vmatpush1.msra.mxu0 0.0
    %841 = vmatprep.subr.mxu0 0.0
    %842 = vmatpush1.msra.mxu0 0.0
    %843 = vmatprep.subr.mxu0 0.0
    %844 = vmatpush1.msra.mxu0 0.0
    %845 = vmatprep.subr.mxu0 0.0
    %846 = vmatpush1.msra.mxu0 0.0
    %847 = vmatprep.mubr.f32.mxu0 0.0
    %848 = vmatmul.mubr.f32.gmra.mrb[0].mxu0 %v710
    %v849 = vpop.f32.mrb[0].mxu0
    %v850 = vadd.f32 %v703, %v849
    %v851 = vpop.f32.mrb[0].mxu0
    %v852 = vadd.f32 %v704, %v851
    %853 = vdwg.mxu0
    %v854 = vadd.f32 %v779, %v193
    %v855 = vadd.f32 %v781, %v195
    %v856 = vadd.f32 %v850, %v264
    %v857 = vadd.f32 %v852, %v266
    %v858 = vxor.u32 %v854, 2147483648
    %v859 = vxor.u32 %v855, 2147483648
    %v860 = vxor.u32 %v856, 2147483648
    %v861 = vxor.u32 %v857, 2147483648
    %v862 = vmul.f32 %v858, 1.442695
    %v863 = vpow.pop %v862
    %v864 = vmul.f32 %v859, 1.442695
    %v865 = vpow.pop %v864
    %v866 = vmul.f32 %v860, 1.442695
    %v867 = vpow.pop %v866
    %v868 = vmul.f32 %v861, 1.442695
    %v869 = vpow.pop %v868
    %v870 = vadd.f32 %v863, 1.0
    %v871 = vadd.f32 %v865, 1.0
    %v872 = vadd.f32 %v867, 1.0
    %v873 = vadd.f32 %v869, 1.0
    %v874 = vrcp.pop %v870
    %v875 = vmul.f32 1.0, %v874
    %v876 = vrcp.pop %v871
    %v877 = vmul.f32 1.0, %v876
    %v878 = vrcp.pop %v872
    %v879 = vmul.f32 1.0, %v878
    %v880 = vrcp.pop %v873
    %v881 = vmul.f32 1.0, %v880
    %v882 = vmul.f32 %v854, %v875
    %v883 = vmul.f32 %v855, %v877
    %v884 = vmul.f32 %v856, %v879
    %v885 = vmul.f32 %v857, %v881
    %886 = vmatprep.subr.mxu0 0.0
    %887 = vmatpush1.msra.mxu0 %v300
    %888 = vmatprep.subr.mxu0 0.0
    %889 = vmatpush1.msra.mxu0 %v301
    %890 = vmatprep.subr.mxu0 0.0
    %891 = vmatpush1.msra.mxu0 %v302
    %892 = vmatprep.subr.mxu0 0.0
    %893 = vmatpush1.msra.mxu0 %v303
    %894 = vmatprep.subr.mxu0 0.0
    %895 = vmatpush1.msra.mxu0 %v304
    %896 = vmatprep.subr.mxu0 0.0
    %897 = vmatpush1.msra.mxu0 %v305
    %898 = vmatprep.subr.mxu0 0.0
    %899 = vmatpush1.msra.mxu0 %v306
    %900 = vmatprep.subr.mxu0 0.0
    %901 = vmatpush1.msra.mxu0 %v307
    %902 = vmatprep.subr.mxu0 0.0
    %903 = vmatpush1.msra.mxu0 %v308
    %904 = vmatprep.subr.mxu0 0.0
    %905 = vmatpush1.msra.mxu0 %v309
    %906 = vmatprep.subr.mxu0 0.0
    %907 = vmatpush1.msra.mxu0 %v310
    %908 = vmatprep.subr.mxu0 0.0
    %909 = vmatpush1.msra.mxu0 %v311
    %910 = vmatprep.subr.mxu0 0.0
    %911 = vmatpush1.msra.mxu0 %v312
    %912 = vmatprep.subr.mxu0 0.0
    %913 = vmatpush1.msra.mxu0 %v313
    %914 = vmatprep.subr.mxu0 0.0
    %915 = vmatpush1.msra.mxu0 %v314
    %916 = vmatprep.subr.mxu0 0.0
    %917 = vmatpush1.msra.mxu0 %v315
    %918 = vmatprep.subr.mxu0 0.0
    %919 = vmatpush1.msra.mxu0 %v316
    %920 = vmatprep.subr.mxu0 0.0
    %921 = vmatpush1.msra.mxu0 %v317
    %922 = vmatprep.subr.mxu0 0.0
    %923 = vmatpush1.msra.mxu0 %v318
    %924 = vmatprep.subr.mxu0 0.0
    %925 = vmatpush1.msra.mxu0 %v319
    %926 = vmatprep.subr.mxu0 0.0
    %927 = vmatpush1.msra.mxu0 %v320
    %928 = vmatprep.subr.mxu0 0.0
    %929 = vmatpush1.msra.mxu0 %v321
    %930 = vmatprep.subr.mxu0 0.0
    %931 = vmatpush1.msra.mxu0 %v322
    %932 = vmatprep.subr.mxu0 0.0
    %933 = vmatpush1.msra.mxu0 %v323
    %934 = vmatprep.subr.mxu0 0.0
    %935 = vmatpush1.msra.mxu0 %v324
    %936 = vmatprep.subr.mxu0 0.0
    %937 = vmatpush1.msra.mxu0 %v325
    %938 = vmatprep.subr.mxu0 0.0
    %939 = vmatpush1.msra.mxu0 %v326
    %940 = vmatprep.subr.mxu0 0.0
    %941 = vmatpush1.msra.mxu0 %v327
    %942 = vmatprep.subr.mxu0 0.0
    %943 = vmatpush1.msra.mxu0 %v328
    %944 = vmatprep.subr.mxu0 0.0
    %945 = vmatpush1.msra.mxu0 %v329
    %946 = vmatprep.subr.mxu0 0.0
    %947 = vmatpush1.msra.mxu0 %v330
    %948 = vmatprep.subr.mxu0 0.0
    %949 = vmatpush1.msra.mxu0 %v331
    %950 = vmatprep.mubr.f32.mxu0 %v883
    %951 = vmatmul.mubr.f32.gmra.mrb[0].mxu0 %v882
    %v952 = vpop.f32.mrb[0].mxu0
    %v953 = vadd.f32 %v551, %v952
    %v954 = vpop.f32.mrb[0].mxu0
    %955 = vdwg.mxu0
    %956 = vmatprep.subr.mxu0 0.0
    %957 = vmatpush1.msra.mxu0 %v332
    %958 = vmatprep.subr.mxu0 0.0
    %959 = vmatpush1.msra.mxu0 %v333
    %960 = vmatprep.subr.mxu0 0.0
    %961 = vmatpush1.msra.mxu0 %v334
    %962 = vmatprep.subr.mxu0 0.0
    %963 = vmatpush1.msra.mxu0 %v335
    %964 = vmatprep.subr.mxu0 0.0
    %965 = vmatpush1.msra.mxu0 %v336
    %966 = vmatprep.subr.mxu0 0.0
    %967 = vmatpush1.msra.mxu0 %v337
    %968 = vmatprep.subr.mxu0 0.0
    %969 = vmatpush1.msra.mxu0 %v338
    %970 = vmatprep.subr.mxu0 0.0
    %971 = vmatpush1.msra.mxu0 %v339
    %972 = vmatprep.subr.mxu0 0.0
    %973 = vmatpush1.msra.mxu0 %v340
    %974 = vmatprep.subr.mxu0 0.0
    %975 = vmatpush1.msra.mxu0 %v341
    %976 = vmatprep.subr.mxu0 0.0
    %977 = vmatpush1.msra.mxu0 %v342
    %978 = vmatprep.subr.mxu0 0.0
    %979 = vmatpush1.msra.mxu0 %v343
    %980 = vmatprep.subr.mxu0 0.0
    %981 = vmatpush1.msra.mxu0 %v344
    %982 = vmatprep.subr.mxu0 0.0
    %983 = vmatpush1.msra.mxu0 %v345
    %984 = vmatprep.subr.mxu0 0.0
    %985 = vmatpush1.msra.mxu0 %v346
    %986 = vmatprep.subr.mxu0 0.0
    %987 = vmatpush1.msra.mxu0 %v347
    %988 = vmatprep.subr.mxu0 0.0
    %989 = vmatpush1.msra.mxu0 %v348
    %990 = vmatprep.subr.mxu0 0.0
    %991 = vmatpush1.msra.mxu0 %v349
    %992 = vmatprep.subr.mxu0 0.0
    %993 = vmatpush1.msra.mxu0 %v350
    %994 = vmatprep.subr.mxu0 0.0
    %995 = vmatpush1.msra.mxu0 %v351
    %996 = vmatprep.subr.mxu0 0.0
    %997 = vmatpush1.msra.mxu0 %v352
    %998 = vmatprep.subr.mxu0 0.0
    %999 = vmatpush1.msra.mxu0 %v353
    %1000 = vmatprep.subr.mxu0 0.0
    %1001 = vmatpush1.msra.mxu0 %v354
    %1002 = vmatprep.subr.mxu0 0.0
    %1003 = vmatpush1.msra.mxu0 %v355
    %1004 = vmatprep.subr.mxu0 0.0
    %1005 = vmatpush1.msra.mxu0 %v356
    %1006 = vmatprep.subr.mxu0 0.0
    %1007 = vmatpush1.msra.mxu0 %v357
    %1008 = vmatprep.subr.mxu0 0.0
    %1009 = vmatpush1.msra.mxu0 %v358
    %1010 = vmatprep.subr.mxu0 0.0
    %1011 = vmatpush1.msra.mxu0 %v359
    %1012 = vmatprep.subr.mxu0 0.0
    %1013 = vmatpush1.msra.mxu0 %v360
    %1014 = vmatprep.subr.mxu0 0.0
    %1015 = vmatpush1.msra.mxu0 %v361
    %1016 = vmatprep.subr.mxu0 0.0
    %1017 = vmatpush1.msra.mxu0 %v362
    %1018 = vmatprep.subr.mxu0 0.0
    %1019 = vmatpush1.msra.mxu0 %v363
    %1020 = vmatprep.mubr.f32.mxu0 %v885
    %1021 = vmatmul.mubr.f32.gmra.mrb[0].mxu0 %v884
    %v1022 = vpop.f32.mrb[0].mxu0
    %v1023 = vadd.f32 %v953, %v1022
    %v1024 = vpop.f32.mrb[0].mxu0
    %1025 = vdwg.mxu0
    %v1026 = vsub.f32 %v692, %v1023
    %v1027 = vld [vmem:[%s2 + $0x180] sm:$0x30]
    %v1028 = vld [vmem:[%s2 + $0x188] sm:$0x30]
    %v1029 = vld [vmem:[%s2 + $0x190] sm:$0x30]
    %v1030 = vld [vmem:[%s2 + $0x198] sm:$0x30]
    %v1035 = vrot.slane %v1027, 4
    %v1036 = vrot.slane %v1028, 4
    %v1037 = vrot.slane %v1029, 4
    %v1038 = vrot.slane %v1030, 4
    %v1044 = vsel %vm370, %v1026, 0
    %1046 = vmatprep.subr.mxu0 %v269
    %1047 = vmatpush1.msra.mxu0 %v268
    %1048 = vmatprep.subr.mxu0 %v273
    %1049 = vmatpush1.msra.mxu0 %v272
    %1050 = vmatprep.subr.mxu0 %v277
    %1051 = vmatpush1.msra.mxu0 %v276
    %1052 = vmatprep.subr.mxu0 %v281
    %1053 = vmatpush1.msra.mxu0 %v280
    %1054 = vmatprep.subr.mxu0 %v285
    %1055 = vmatpush1.msra.mxu0 %v284
    %1056 = vmatprep.subr.mxu0 %v289
    %1057 = vmatpush1.msra.mxu0 %v288
    %1058 = vmatprep.subr.mxu0 %v293
    %1059 = vmatpush1.msra.mxu0 %v292
    %1060 = vmatprep.subr.mxu0 %v297
    %1061 = vmatpush1.msra.mxu0 %v296
    %1062 = vmatprep.subr.mxu0 0.0
    %1063 = vmatpush1.msra.mxu0 0.0
    %1064 = vmatprep.subr.mxu0 0.0
    %1065 = vmatpush1.msra.mxu0 0.0
    %1066 = vmatprep.subr.mxu0 0.0
    %1067 = vmatpush1.msra.mxu0 0.0
    %1068 = vmatprep.subr.mxu0 0.0
    %1069 = vmatpush1.msra.mxu0 0.0
    %1070 = vmatprep.subr.mxu0 0.0
    %1071 = vmatpush1.msra.mxu0 0.0
    %1072 = vmatprep.subr.mxu0 0.0
    %1073 = vmatpush1.msra.mxu0 0.0
    %1074 = vmatprep.subr.mxu0 0.0
    %1075 = vmatpush1.msra.mxu0 0.0
    %1076 = vmatprep.subr.mxu0 0.0
    %1077 = vmatpush1.msra.mxu0 0.0
    %1078 = vmatprep.subr.mxu0 0.0
    %1079 = vmatpush1.msra.mxu0 0.0
    %1080 = vmatprep.subr.mxu0 0.0
    %1081 = vmatpush1.msra.mxu0 0.0
    %1082 = vmatprep.subr.mxu0 0.0
    %1083 = vmatpush1.msra.mxu0 0.0
    %1084 = vmatprep.subr.mxu0 0.0
    %1085 = vmatpush1.msra.mxu0 0.0
    %1086 = vmatprep.subr.mxu0 0.0
    %1087 = vmatpush1.msra.mxu0 0.0
    %1088 = vmatprep.subr.mxu0 0.0
    %1089 = vmatpush1.msra.mxu0 0.0
    %1090 = vmatprep.subr.mxu0 0.0
    %1091 = vmatpush1.msra.mxu0 0.0
    %1092 = vmatprep.subr.mxu0 0.0
    %1093 = vmatpush1.msra.mxu0 0.0
    %1094 = vmatprep.subr.mxu0 0.0
    %1095 = vmatpush1.msra.mxu0 0.0
    %1096 = vmatprep.subr.mxu0 0.0
    %1097 = vmatpush1.msra.mxu0 0.0
    %1098 = vmatprep.subr.mxu0 0.0
    %1099 = vmatpush1.msra.mxu0 0.0
    %1100 = vmatprep.subr.mxu0 0.0
    %1101 = vmatpush1.msra.mxu0 0.0
    %1102 = vmatprep.subr.mxu0 0.0
    %1103 = vmatpush1.msra.mxu0 0.0
    %1104 = vmatprep.subr.mxu0 0.0
    %1105 = vmatpush1.msra.mxu0 0.0
    %1106 = vmatprep.subr.mxu0 0.0
    %1107 = vmatpush1.msra.mxu0 0.0
    %1108 = vmatprep.subr.mxu0 0.0
    %1109 = vmatpush1.msra.mxu0 0.0
    %1110 = vmatprep.mubr.f32.mxu0 0.0
    %1111 = vmatmul.mubr.f32.gmra.mrb[0].mxu0 %v1044
    %v1112 = vpop.f32.mrb[0].mxu0
    %v1113 = vadd.f32 %v1035, %v1112
    %v1114 = vpop.f32.mrb[0].mxu0
    %v1115 = vadd.f32 %v1036, %v1114
    %1116 = vdwg.mxu0
    %1117 = vmatprep.subr.mxu0 %v271
    %1118 = vmatpush1.msra.mxu0 %v270
    %1119 = vmatprep.subr.mxu0 %v275
    %1120 = vmatpush1.msra.mxu0 %v274
    %1121 = vmatprep.subr.mxu0 %v279
    %1122 = vmatpush1.msra.mxu0 %v278
    %1123 = vmatprep.subr.mxu0 %v283
    %1124 = vmatpush1.msra.mxu0 %v282
    %1125 = vmatprep.subr.mxu0 %v287
    %1126 = vmatpush1.msra.mxu0 %v286
    %1127 = vmatprep.subr.mxu0 %v291
    %1128 = vmatpush1.msra.mxu0 %v290
    %1129 = vmatprep.subr.mxu0 %v295
    %1130 = vmatpush1.msra.mxu0 %v294
    %1131 = vmatprep.subr.mxu0 %v299
    %1132 = vmatpush1.msra.mxu0 %v298
    %1133 = vmatprep.subr.mxu0 0.0
    %1134 = vmatpush1.msra.mxu0 0.0
    %1135 = vmatprep.subr.mxu0 0.0
    %1136 = vmatpush1.msra.mxu0 0.0
    %1137 = vmatprep.subr.mxu0 0.0
    %1138 = vmatpush1.msra.mxu0 0.0
    %1139 = vmatprep.subr.mxu0 0.0
    %1140 = vmatpush1.msra.mxu0 0.0
    %1141 = vmatprep.subr.mxu0 0.0
    %1142 = vmatpush1.msra.mxu0 0.0
    %1143 = vmatprep.subr.mxu0 0.0
    %1144 = vmatpush1.msra.mxu0 0.0
    %1145 = vmatprep.subr.mxu0 0.0
    %1146 = vmatpush1.msra.mxu0 0.0
    %1147 = vmatprep.subr.mxu0 0.0
    %1148 = vmatpush1.msra.mxu0 0.0
    %1149 = vmatprep.subr.mxu0 0.0
    %1150 = vmatpush1.msra.mxu0 0.0
    %1151 = vmatprep.subr.mxu0 0.0
    %1152 = vmatpush1.msra.mxu0 0.0
    %1153 = vmatprep.subr.mxu0 0.0
    %1154 = vmatpush1.msra.mxu0 0.0
    %1155 = vmatprep.subr.mxu0 0.0
    %1156 = vmatpush1.msra.mxu0 0.0
    %1157 = vmatprep.subr.mxu0 0.0
    %1158 = vmatpush1.msra.mxu0 0.0
    %1159 = vmatprep.subr.mxu0 0.0
    %1160 = vmatpush1.msra.mxu0 0.0
    %1161 = vmatprep.subr.mxu0 0.0
    %1162 = vmatpush1.msra.mxu0 0.0
    %1163 = vmatprep.subr.mxu0 0.0
    %1164 = vmatpush1.msra.mxu0 0.0
    %1165 = vmatprep.subr.mxu0 0.0
    %1166 = vmatpush1.msra.mxu0 0.0
    %1167 = vmatprep.subr.mxu0 0.0
    %1168 = vmatpush1.msra.mxu0 0.0
    %1169 = vmatprep.subr.mxu0 0.0
    %1170 = vmatpush1.msra.mxu0 0.0
    %1171 = vmatprep.subr.mxu0 0.0
    %1172 = vmatpush1.msra.mxu0 0.0
    %1173 = vmatprep.subr.mxu0 0.0
    %1174 = vmatpush1.msra.mxu0 0.0
    %1175 = vmatprep.subr.mxu0 0.0
    %1176 = vmatpush1.msra.mxu0 0.0
    %1177 = vmatprep.subr.mxu0 0.0
    %1178 = vmatpush1.msra.mxu0 0.0
    %1179 = vmatprep.subr.mxu0 0.0
    %1180 = vmatpush1.msra.mxu0 0.0
    %1181 = vmatprep.mubr.f32.mxu0 0.0
    %1182 = vmatmul.mubr.f32.gmra.mrb[0].mxu0 %v1044
    %v1183 = vpop.f32.mrb[0].mxu0
    %v1184 = vadd.f32 %v1037, %v1183
    %v1185 = vpop.f32.mrb[0].mxu0
    %v1186 = vadd.f32 %v1038, %v1185
    %1187 = vdwg.mxu0
    %v1188 = vadd.f32 %v1113, %v193
    %v1189 = vadd.f32 %v1115, %v195
    %v1190 = vadd.f32 %v1184, %v264
    %v1191 = vadd.f32 %v1186, %v266
    %v1192 = vxor.u32 %v1188, 2147483648
    %v1193 = vxor.u32 %v1189, 2147483648
    %v1194 = vxor.u32 %v1190, 2147483648
    %v1195 = vxor.u32 %v1191, 2147483648
    %v1196 = vmul.f32 %v1192, 1.442695
    %v1197 = vpow.pop %v1196
    %v1198 = vmul.f32 %v1193, 1.442695
    %v1199 = vpow.pop %v1198
    %v1200 = vmul.f32 %v1194, 1.442695
    %v1201 = vpow.pop %v1200
    %v1202 = vmul.f32 %v1195, 1.442695
    %v1203 = vpow.pop %v1202
    %v1204 = vadd.f32 %v1197, 1.0
    %v1205 = vadd.f32 %v1199, 1.0
    %v1206 = vadd.f32 %v1201, 1.0
    %v1207 = vadd.f32 %v1203, 1.0
    %v1208 = vrcp.pop %v1204
    %v1209 = vmul.f32 1.0, %v1208
    %v1210 = vrcp.pop %v1205
    %v1211 = vmul.f32 1.0, %v1210
    %v1212 = vrcp.pop %v1206
    %v1213 = vmul.f32 1.0, %v1212
    %v1214 = vrcp.pop %v1207
    %v1215 = vmul.f32 1.0, %v1214
    %v1216 = vmul.f32 %v1188, %v1209
    %v1217 = vmul.f32 %v1189, %v1211
    %v1218 = vmul.f32 %v1190, %v1213
    %v1219 = vmul.f32 %v1191, %v1215
    %1220 = vmatprep.subr.mxu0 0.0
    %1221 = vmatpush1.msra.mxu0 %v300
    %1222 = vmatprep.subr.mxu0 0.0
    %1223 = vmatpush1.msra.mxu0 %v301
    %1224 = vmatprep.subr.mxu0 0.0
    %1225 = vmatpush1.msra.mxu0 %v302
    %1226 = vmatprep.subr.mxu0 0.0
    %1227 = vmatpush1.msra.mxu0 %v303
    %1228 = vmatprep.subr.mxu0 0.0
    %1229 = vmatpush1.msra.mxu0 %v304
    %1230 = vmatprep.subr.mxu0 0.0
    %1231 = vmatpush1.msra.mxu0 %v305
    %1232 = vmatprep.subr.mxu0 0.0
    %1233 = vmatpush1.msra.mxu0 %v306
    %1234 = vmatprep.subr.mxu0 0.0
    %1235 = vmatpush1.msra.mxu0 %v307
    %1236 = vmatprep.subr.mxu0 0.0
    %1237 = vmatpush1.msra.mxu0 %v308
    %1238 = vmatprep.subr.mxu0 0.0
    %1239 = vmatpush1.msra.mxu0 %v309
    %1240 = vmatprep.subr.mxu0 0.0
    %1241 = vmatpush1.msra.mxu0 %v310
    %1242 = vmatprep.subr.mxu0 0.0
    %1243 = vmatpush1.msra.mxu0 %v311
    %1244 = vmatprep.subr.mxu0 0.0
    %1245 = vmatpush1.msra.mxu0 %v312
    %1246 = vmatprep.subr.mxu0 0.0
    %1247 = vmatpush1.msra.mxu0 %v313
    %1248 = vmatprep.subr.mxu0 0.0
    %1249 = vmatpush1.msra.mxu0 %v314
    %1250 = vmatprep.subr.mxu0 0.0
    %1251 = vmatpush1.msra.mxu0 %v315
    %1252 = vmatprep.subr.mxu0 0.0
    %1253 = vmatpush1.msra.mxu0 %v316
    %1254 = vmatprep.subr.mxu0 0.0
    %1255 = vmatpush1.msra.mxu0 %v317
    %1256 = vmatprep.subr.mxu0 0.0
    %1257 = vmatpush1.msra.mxu0 %v318
    %1258 = vmatprep.subr.mxu0 0.0
    %1259 = vmatpush1.msra.mxu0 %v319
    %1260 = vmatprep.subr.mxu0 0.0
    %1261 = vmatpush1.msra.mxu0 %v320
    %1262 = vmatprep.subr.mxu0 0.0
    %1263 = vmatpush1.msra.mxu0 %v321
    %1264 = vmatprep.subr.mxu0 0.0
    %1265 = vmatpush1.msra.mxu0 %v322
    %1266 = vmatprep.subr.mxu0 0.0
    %1267 = vmatpush1.msra.mxu0 %v323
    %1268 = vmatprep.subr.mxu0 0.0
    %1269 = vmatpush1.msra.mxu0 %v324
    %1270 = vmatprep.subr.mxu0 0.0
    %1271 = vmatpush1.msra.mxu0 %v325
    %1272 = vmatprep.subr.mxu0 0.0
    %1273 = vmatpush1.msra.mxu0 %v326
    %1274 = vmatprep.subr.mxu0 0.0
    %1275 = vmatpush1.msra.mxu0 %v327
    %1276 = vmatprep.subr.mxu0 0.0
    %1277 = vmatpush1.msra.mxu0 %v328
    %1278 = vmatprep.subr.mxu0 0.0
    %1279 = vmatpush1.msra.mxu0 %v329
    %1280 = vmatprep.subr.mxu0 0.0
    %1281 = vmatpush1.msra.mxu0 %v330
    %1282 = vmatprep.subr.mxu0 0.0
    %1283 = vmatpush1.msra.mxu0 %v331
    %1284 = vmatprep.mubr.f32.mxu0 %v1217
    %1285 = vmatmul.mubr.f32.gmra.mrb[0].mxu0 %v1216
    %v1286 = vpop.f32.mrb[0].mxu0
    %v1287 = vadd.f32 %v551, %v1286
    %v1288 = vpop.f32.mrb[0].mxu0
    %1289 = vdwg.mxu0
    %1290 = vmatprep.subr.mxu0 0.0
    %1291 = vmatpush1.msra.mxu0 %v332
    %1292 = vmatprep.subr.mxu0 0.0
    %1293 = vmatpush1.msra.mxu0 %v333
    %1294 = vmatprep.subr.mxu0 0.0
    %1295 = vmatpush1.msra.mxu0 %v334
    %1296 = vmatprep.subr.mxu0 0.0
    %1297 = vmatpush1.msra.mxu0 %v335
    %1298 = vmatprep.subr.mxu0 0.0
    %1299 = vmatpush1.msra.mxu0 %v336
    %1300 = vmatprep.subr.mxu0 0.0
    %1301 = vmatpush1.msra.mxu0 %v337
    %1302 = vmatprep.subr.mxu0 0.0
    %1303 = vmatpush1.msra.mxu0 %v338
    %1304 = vmatprep.subr.mxu0 0.0
    %1305 = vmatpush1.msra.mxu0 %v339
    %1306 = vmatprep.subr.mxu0 0.0
    %1307 = vmatpush1.msra.mxu0 %v340
    %1308 = vmatprep.subr.mxu0 0.0
    %1309 = vmatpush1.msra.mxu0 %v341
    %1310 = vmatprep.subr.mxu0 0.0
    %1311 = vmatpush1.msra.mxu0 %v342
    %1312 = vmatprep.subr.mxu0 0.0
    %1313 = vmatpush1.msra.mxu0 %v343
    %1314 = vmatprep.subr.mxu0 0.0
    %1315 = vmatpush1.msra.mxu0 %v344
    %1316 = vmatprep.subr.mxu0 0.0
    %1317 = vmatpush1.msra.mxu0 %v345
    %1318 = vmatprep.subr.mxu0 0.0
    %1319 = vmatpush1.msra.mxu0 %v346
    %1320 = vmatprep.subr.mxu0 0.0
    %1321 = vmatpush1.msra.mxu0 %v347
    %1322 = vmatprep.subr.mxu0 0.0
    %1323 = vmatpush1.msra.mxu0 %v348
    %1324 = vmatprep.subr.mxu0 0.0
    %1325 = vmatpush1.msra.mxu0 %v349
    %1326 = vmatprep.subr.mxu0 0.0
    %1327 = vmatpush1.msra.mxu0 %v350
    %1328 = vmatprep.subr.mxu0 0.0
    %1329 = vmatpush1.msra.mxu0 %v351
    %1330 = vmatprep.subr.mxu0 0.0
    %1331 = vmatpush1.msra.mxu0 %v352
    %1332 = vmatprep.subr.mxu0 0.0
    %1333 = vmatpush1.msra.mxu0 %v353
    %1334 = vmatprep.subr.mxu0 0.0
    %1335 = vmatpush1.msra.mxu0 %v354
    %1336 = vmatprep.subr.mxu0 0.0
    %1337 = vmatpush1.msra.mxu0 %v355
    %1338 = vmatprep.subr.mxu0 0.0
    %1339 = vmatpush1.msra.mxu0 %v356
    %1340 = vmatprep.subr.mxu0 0.0
    %1341 = vmatpush1.msra.mxu0 %v357
    %1342 = vmatprep.subr.mxu0 0.0
    %1343 = vmatpush1.msra.mxu0 %v358
    %1344 = vmatprep.subr.mxu0 0.0
    %1345 = vmatpush1.msra.mxu0 %v359
    %1346 = vmatprep.subr.mxu0 0.0
    %1347 = vmatpush1.msra.mxu0 %v360
    %1348 = vmatprep.subr.mxu0 0.0
    %1349 = vmatpush1.msra.mxu0 %v361
    %1350 = vmatprep.subr.mxu0 0.0
    %1351 = vmatpush1.msra.mxu0 %v362
    %1352 = vmatprep.subr.mxu0 0.0
    %1353 = vmatpush1.msra.mxu0 %v363
    %1354 = vmatprep.mubr.f32.mxu0 %v1219
    %1355 = vmatmul.mubr.f32.gmra.mrb[0].mxu0 %v1218
    %v1356 = vpop.f32.mrb[0].mxu0
    %v1357 = vadd.f32 %v1287, %v1356
    %v1358 = vpop.f32.mrb[0].mxu0
    %1359 = vdwg.mxu0
    %v1360 = vsub.f32 %v1026, %v1357
    %v1361 = vld [vmem:[%s2 + $0x180] sm:$0xc0]
    %v1362 = vld [vmem:[%s2 + $0x188] sm:$0xc0]
    %v1363 = vld [vmem:[%s2 + $0x190] sm:$0xc0]
    %v1364 = vld [vmem:[%s2 + $0x198] sm:$0xc0]
    %v1369 = vrot.slane %v1361, 6
    %v1370 = vrot.slane %v1362, 6
    %v1371 = vrot.slane %v1363, 6
    %v1372 = vrot.slane %v1364, 6
    %v1378 = vsel %vm370, %v1360, 0
    %1380 = vmatprep.subr.mxu0 %v269
    %1381 = vmatpush1.msra.mxu0 %v268
    %1382 = vmatprep.subr.mxu0 %v273
    %1383 = vmatpush1.msra.mxu0 %v272
    %1384 = vmatprep.subr.mxu0 %v277
    %1385 = vmatpush1.msra.mxu0 %v276
    %1386 = vmatprep.subr.mxu0 %v281
    %1387 = vmatpush1.msra.mxu0 %v280
    %1388 = vmatprep.subr.mxu0 %v285
    %1389 = vmatpush1.msra.mxu0 %v284
    %1390 = vmatprep.subr.mxu0 %v289
    %1391 = vmatpush1.msra.mxu0 %v288
    %1392 = vmatprep.subr.mxu0 %v293
    %1393 = vmatpush1.msra.mxu0 %v292
    %1394 = vmatprep.subr.mxu0 %v297
    %1395 = vmatpush1.msra.mxu0 %v296
    %1396 = vmatprep.subr.mxu0 0.0
    %1397 = vmatpush1.msra.mxu0 0.0
    %1398 = vmatprep.subr.mxu0 0.0
    %1399 = vmatpush1.msra.mxu0 0.0
    %1400 = vmatprep.subr.mxu0 0.0
    %1401 = vmatpush1.msra.mxu0 0.0
    %1402 = vmatprep.subr.mxu0 0.0
    %1403 = vmatpush1.msra.mxu0 0.0
    %1404 = vmatprep.subr.mxu0 0.0
    %1405 = vmatpush1.msra.mxu0 0.0
    %1406 = vmatprep.subr.mxu0 0.0
    %1407 = vmatpush1.msra.mxu0 0.0
    %1408 = vmatprep.subr.mxu0 0.0
    %1409 = vmatpush1.msra.mxu0 0.0
    %1410 = vmatprep.subr.mxu0 0.0
    %1411 = vmatpush1.msra.mxu0 0.0
    %1412 = vmatprep.subr.mxu0 0.0
    %1413 = vmatpush1.msra.mxu0 0.0
    %1414 = vmatprep.subr.mxu0 0.0
    %1415 = vmatpush1.msra.mxu0 0.0
    %1416 = vmatprep.subr.mxu0 0.0
    %1417 = vmatpush1.msra.mxu0 0.0
    %1418 = vmatprep.subr.mxu0 0.0
    %1419 = vmatpush1.msra.mxu0 0.0
    %1420 = vmatprep.subr.mxu0 0.0
    %1421 = vmatpush1.msra.mxu0 0.0
    %1422 = vmatprep.subr.mxu0 0.0
    %1423 = vmatpush1.msra.mxu0 0.0
    %1424 = vmatprep.subr.mxu0 0.0
    %1425 = vmatpush1.msra.mxu0 0.0
    %1426 = vmatprep.subr.mxu0 0.0
    %1427 = vmatpush1.msra.mxu0 0.0
    %1428 = vmatprep.subr.mxu0 0.0
    %1429 = vmatpush1.msra.mxu0 0.0
    %1430 = vmatprep.subr.mxu0 0.0
    %1431 = vmatpush1.msra.mxu0 0.0
    %1432 = vmatprep.subr.mxu0 0.0
    %1433 = vmatpush1.msra.mxu0 0.0
    %1434 = vmatprep.subr.mxu0 0.0
    %1435 = vmatpush1.msra.mxu0 0.0
    %1436 = vmatprep.subr.mxu0 0.0
    %1437 = vmatpush1.msra.mxu0 0.0
    %1438 = vmatprep.subr.mxu0 0.0
    %1439 = vmatpush1.msra.mxu0 0.0
    %1440 = vmatprep.subr.mxu0 0.0
    %1441 = vmatpush1.msra.mxu0 0.0
    %1442 = vmatprep.subr.mxu0 0.0
    %1443 = vmatpush1.msra.mxu0 0.0
    %1444 = vmatprep.mubr.f32.mxu0 0.0
    %1445 = vmatmul.mubr.f32.gmra.mrb[0].mxu0 %v1378
    %v1446 = vpop.f32.mrb[0].mxu0
    %v1447 = vadd.f32 %v1369, %v1446
    %v1448 = vpop.f32.mrb[0].mxu0
    %v1449 = vadd.f32 %v1370, %v1448
    %1450 = vdwg.mxu0
    %1451 = vmatprep.subr.mxu0 %v271
    %1452 = vmatpush1.msra.mxu0 %v270
    %1453 = vmatprep.subr.mxu0 %v275
    %1454 = vmatpush1.msra.mxu0 %v274
    %1455 = vmatprep.subr.mxu0 %v279
    %1456 = vmatpush1.msra.mxu0 %v278
    %1457 = vmatprep.subr.mxu0 %v283
    %1458 = vmatpush1.msra.mxu0 %v282
    %1459 = vmatprep.subr.mxu0 %v287
    %1460 = vmatpush1.msra.mxu0 %v286
    %1461 = vmatprep.subr.mxu0 %v291
    %1462 = vmatpush1.msra.mxu0 %v290
    %1463 = vmatprep.subr.mxu0 %v295
    %1464 = vmatpush1.msra.mxu0 %v294
    %1465 = vmatprep.subr.mxu0 %v299
    %1466 = vmatpush1.msra.mxu0 %v298
    %1467 = vmatprep.subr.mxu0 0.0
    %1468 = vmatpush1.msra.mxu0 0.0
    %1469 = vmatprep.subr.mxu0 0.0
    %1470 = vmatpush1.msra.mxu0 0.0
    %1471 = vmatprep.subr.mxu0 0.0
    %1472 = vmatpush1.msra.mxu0 0.0
    %1473 = vmatprep.subr.mxu0 0.0
    %1474 = vmatpush1.msra.mxu0 0.0
    %1475 = vmatprep.subr.mxu0 0.0
    %1476 = vmatpush1.msra.mxu0 0.0
    %1477 = vmatprep.subr.mxu0 0.0
    %1478 = vmatpush1.msra.mxu0 0.0
    %1479 = vmatprep.subr.mxu0 0.0
    %1480 = vmatpush1.msra.mxu0 0.0
    %1481 = vmatprep.subr.mxu0 0.0
    %1482 = vmatpush1.msra.mxu0 0.0
    %1483 = vmatprep.subr.mxu0 0.0
    %1484 = vmatpush1.msra.mxu0 0.0
    %1485 = vmatprep.subr.mxu0 0.0
    %1486 = vmatpush1.msra.mxu0 0.0
    %1487 = vmatprep.subr.mxu0 0.0
    %1488 = vmatpush1.msra.mxu0 0.0
    %1489 = vmatprep.subr.mxu0 0.0
    %1490 = vmatpush1.msra.mxu0 0.0
    %1491 = vmatprep.subr.mxu0 0.0
    %1492 = vmatpush1.msra.mxu0 0.0
    %1493 = vmatprep.subr.mxu0 0.0
    %1494 = vmatpush1.msra.mxu0 0.0
    %1495 = vmatprep.subr.mxu0 0.0
    %1496 = vmatpush1.msra.mxu0 0.0
    %1497 = vmatprep.subr.mxu0 0.0
    %1498 = vmatpush1.msra.mxu0 0.0
    %1499 = vmatprep.subr.mxu0 0.0
    %1500 = vmatpush1.msra.mxu0 0.0
    %1501 = vmatprep.subr.mxu0 0.0
    %1502 = vmatpush1.msra.mxu0 0.0
    %1503 = vmatprep.subr.mxu0 0.0
    %1504 = vmatpush1.msra.mxu0 0.0
    %1505 = vmatprep.subr.mxu0 0.0
    %1506 = vmatpush1.msra.mxu0 0.0
    %1507 = vmatprep.subr.mxu0 0.0
    %1508 = vmatpush1.msra.mxu0 0.0
    %1509 = vmatprep.subr.mxu0 0.0
    %1510 = vmatpush1.msra.mxu0 0.0
    %1511 = vmatprep.subr.mxu0 0.0
    %1512 = vmatpush1.msra.mxu0 0.0
    %1513 = vmatprep.subr.mxu0 0.0
    %1514 = vmatpush1.msra.mxu0 0.0
    %1515 = vmatprep.mubr.f32.mxu0 0.0
    %1516 = vmatmul.mubr.f32.gmra.mrb[0].mxu0 %v1378
    %v1517 = vpop.f32.mrb[0].mxu0
    %v1518 = vadd.f32 %v1371, %v1517
    %v1519 = vpop.f32.mrb[0].mxu0
    %v1520 = vadd.f32 %v1372, %v1519
    %1521 = vdwg.mxu0
    %v1522 = vadd.f32 %v1447, %v193
    %v1523 = vadd.f32 %v1449, %v195
    %v1524 = vadd.f32 %v1518, %v264
    %v1525 = vadd.f32 %v1520, %v266
    %v1526 = vxor.u32 %v1522, 2147483648
    %v1527 = vxor.u32 %v1523, 2147483648
    %v1528 = vxor.u32 %v1524, 2147483648
    %v1529 = vxor.u32 %v1525, 2147483648
    %v1530 = vmul.f32 %v1526, 1.442695
    %v1531 = vpow.pop %v1530
    %v1532 = vmul.f32 %v1527, 1.442695
    %v1533 = vpow.pop %v1532
    %v1534 = vmul.f32 %v1528, 1.442695
    %v1535 = vpow.pop %v1534
    %v1536 = vmul.f32 %v1529, 1.442695
    %v1537 = vpow.pop %v1536
    %v1538 = vadd.f32 %v1531, 1.0
    %v1539 = vadd.f32 %v1533, 1.0
    %v1540 = vadd.f32 %v1535, 1.0
    %v1541 = vadd.f32 %v1537, 1.0
    %v1542 = vrcp.pop %v1538
    %v1543 = vmul.f32 1.0, %v1542
    %v1544 = vrcp.pop %v1539
    %v1545 = vmul.f32 1.0, %v1544
    %v1546 = vrcp.pop %v1540
    %v1547 = vmul.f32 1.0, %v1546
    %v1548 = vrcp.pop %v1541
    %v1549 = vmul.f32 1.0, %v1548
    %v1550 = vmul.f32 %v1522, %v1543
    %v1551 = vmul.f32 %v1523, %v1545
    %v1552 = vmul.f32 %v1524, %v1547
    %v1553 = vmul.f32 %v1525, %v1549
    %1554 = vmatprep.subr.mxu0 0.0
    %1555 = vmatpush1.msra.mxu0 %v300
    %1556 = vmatprep.subr.mxu0 0.0
    %1557 = vmatpush1.msra.mxu0 %v301
    %1558 = vmatprep.subr.mxu0 0.0
    %1559 = vmatpush1.msra.mxu0 %v302
    %1560 = vmatprep.subr.mxu0 0.0
    %1561 = vmatpush1.msra.mxu0 %v303
    %1562 = vmatprep.subr.mxu0 0.0
    %1563 = vmatpush1.msra.mxu0 %v304
    %1564 = vmatprep.subr.mxu0 0.0
    %1565 = vmatpush1.msra.mxu0 %v305
    %1566 = vmatprep.subr.mxu0 0.0
    %1567 = vmatpush1.msra.mxu0 %v306
    %1568 = vmatprep.subr.mxu0 0.0
    %1569 = vmatpush1.msra.mxu0 %v307
    %1570 = vmatprep.subr.mxu0 0.0
    %1571 = vmatpush1.msra.mxu0 %v308
    %1572 = vmatprep.subr.mxu0 0.0
    %1573 = vmatpush1.msra.mxu0 %v309
    %1574 = vmatprep.subr.mxu0 0.0
    %1575 = vmatpush1.msra.mxu0 %v310
    %1576 = vmatprep.subr.mxu0 0.0
    %1577 = vmatpush1.msra.mxu0 %v311
    %1578 = vmatprep.subr.mxu0 0.0
    %1579 = vmatpush1.msra.mxu0 %v312
    %1580 = vmatprep.subr.mxu0 0.0
    %1581 = vmatpush1.msra.mxu0 %v313
    %1582 = vmatprep.subr.mxu0 0.0
    %1583 = vmatpush1.msra.mxu0 %v314
    %1584 = vmatprep.subr.mxu0 0.0
    %1585 = vmatpush1.msra.mxu0 %v315
    %1586 = vmatprep.subr.mxu0 0.0
    %1587 = vmatpush1.msra.mxu0 %v316
    %1588 = vmatprep.subr.mxu0 0.0
    %1589 = vmatpush1.msra.mxu0 %v317
    %1590 = vmatprep.subr.mxu0 0.0
    %1591 = vmatpush1.msra.mxu0 %v318
    %1592 = vmatprep.subr.mxu0 0.0
    %1593 = vmatpush1.msra.mxu0 %v319
    %1594 = vmatprep.subr.mxu0 0.0
    %1595 = vmatpush1.msra.mxu0 %v320
    %1596 = vmatprep.subr.mxu0 0.0
    %1597 = vmatpush1.msra.mxu0 %v321
    %1598 = vmatprep.subr.mxu0 0.0
    %1599 = vmatpush1.msra.mxu0 %v322
    %1600 = vmatprep.subr.mxu0 0.0
    %1601 = vmatpush1.msra.mxu0 %v323
    %1602 = vmatprep.subr.mxu0 0.0
    %1603 = vmatpush1.msra.mxu0 %v324
    %1604 = vmatprep.subr.mxu0 0.0
    %1605 = vmatpush1.msra.mxu0 %v325
    %1606 = vmatprep.subr.mxu0 0.0
    %1607 = vmatpush1.msra.mxu0 %v326
    %1608 = vmatprep.subr.mxu0 0.0
    %1609 = vmatpush1.msra.mxu0 %v327
    %1610 = vmatprep.subr.mxu0 0.0
    %1611 = vmatpush1.msra.mxu0 %v328
    %1612 = vmatprep.subr.mxu0 0.0
    %1613 = vmatpush1.msra.mxu0 %v329
    %1614 = vmatprep.subr.mxu0 0.0
    %1615 = vmatpush1.msra.mxu0 %v330
    %1616 = vmatprep.subr.mxu0 0.0
    %1617 = vmatpush1.msra.mxu0 %v331
    %1618 = vmatprep.mubr.f32.mxu0 %v1551
    %1619 = vmatmul.mubr.f32.gmra.mrb[0].mxu0 %v1550
    %v1620 = vpop.f32.mrb[0].mxu0
    %v1621 = vadd.f32 %v551, %v1620
    %v1622 = vpop.f32.mrb[0].mxu0
    %1623 = vdwg.mxu0
    %1624 = vmatprep.subr.mxu0 0.0
    %1625 = vmatpush1.msra.mxu0 %v332
    %1626 = vmatprep.subr.mxu0 0.0
    %1627 = vmatpush1.msra.mxu0 %v333
    %1628 = vmatprep.subr.mxu0 0.0
    %1629 = vmatpush1.msra.mxu0 %v334
    %1630 = vmatprep.subr.mxu0 0.0
    %1631 = vmatpush1.msra.mxu0 %v335
    %1632 = vmatprep.subr.mxu0 0.0
    %1633 = vmatpush1.msra.mxu0 %v336
    %1634 = vmatprep.subr.mxu0 0.0
    %1635 = vmatpush1.msra.mxu0 %v337
    %1636 = vmatprep.subr.mxu0 0.0
    %1637 = vmatpush1.msra.mxu0 %v338
    %1638 = vmatprep.subr.mxu0 0.0
    %1639 = vmatpush1.msra.mxu0 %v339
    %1640 = vmatprep.subr.mxu0 0.0
    %1641 = vmatpush1.msra.mxu0 %v340
    %1642 = vmatprep.subr.mxu0 0.0
    %1643 = vmatpush1.msra.mxu0 %v341
    %1644 = vmatprep.subr.mxu0 0.0
    %1645 = vmatpush1.msra.mxu0 %v342
    %1646 = vmatprep.subr.mxu0 0.0
    %1647 = vmatpush1.msra.mxu0 %v343
    %1648 = vmatprep.subr.mxu0 0.0
    %1649 = vmatpush1.msra.mxu0 %v344
    %1650 = vmatprep.subr.mxu0 0.0
    %1651 = vmatpush1.msra.mxu0 %v345
    %1652 = vmatprep.subr.mxu0 0.0
    %1653 = vmatpush1.msra.mxu0 %v346
    %1654 = vmatprep.subr.mxu0 0.0
    %1655 = vmatpush1.msra.mxu0 %v347
    %1656 = vmatprep.subr.mxu0 0.0
    %1657 = vmatpush1.msra.mxu0 %v348
    %1658 = vmatprep.subr.mxu0 0.0
    %1659 = vmatpush1.msra.mxu0 %v349
    %1660 = vmatprep.subr.mxu0 0.0
    %1661 = vmatpush1.msra.mxu0 %v350
    %1662 = vmatprep.subr.mxu0 0.0
    %1663 = vmatpush1.msra.mxu0 %v351
    %1664 = vmatprep.subr.mxu0 0.0
    %1665 = vmatpush1.msra.mxu0 %v352
    %1666 = vmatprep.subr.mxu0 0.0
    %1667 = vmatpush1.msra.mxu0 %v353
    %1668 = vmatprep.subr.mxu0 0.0
    %1669 = vmatpush1.msra.mxu0 %v354
    %1670 = vmatprep.subr.mxu0 0.0
    %1671 = vmatpush1.msra.mxu0 %v355
    %1672 = vmatprep.subr.mxu0 0.0
    %1673 = vmatpush1.msra.mxu0 %v356
    %1674 = vmatprep.subr.mxu0 0.0
    %1675 = vmatpush1.msra.mxu0 %v357
    %1676 = vmatprep.subr.mxu0 0.0
    %1677 = vmatpush1.msra.mxu0 %v358
    %1678 = vmatprep.subr.mxu0 0.0
    %1679 = vmatpush1.msra.mxu0 %v359
    %1680 = vmatprep.subr.mxu0 0.0
    %1681 = vmatpush1.msra.mxu0 %v360
    %1682 = vmatprep.subr.mxu0 0.0
    %1683 = vmatpush1.msra.mxu0 %v361
    %1684 = vmatprep.subr.mxu0 0.0
    %1685 = vmatpush1.msra.mxu0 %v362
    %1686 = vmatprep.subr.mxu0 0.0
    %1687 = vmatpush1.msra.mxu0 %v363
    %1688 = vmatprep.mubr.f32.mxu0 %v1553
    %1689 = vmatmul.mubr.f32.gmra.mrb[0].mxu0 %v1552
    %v1690 = vpop.f32.mrb[0].mxu0
    %v1691 = vadd.f32 %v1621, %v1690
    %v1692 = vpop.f32.mrb[0].mxu0
    %1693 = vdwg.mxu0
    %v1694 = vsub.f32 %v1360, %v1691
    %v1695 = vld [vmem:[%s4] sm:$0xff]
    %v1696 = vld [vmem:[%s4 + $0x8] sm:$0xff]
    %v1697 = vld [vmem:[%s4 + $0x10] sm:$0xff]
    %v1698 = vld [vmem:[%s4 + $0x18] sm:$0xff]
    %v1699 = vld [vmem:[%s4 + $0x20] sm:$0xff]
    %v1700 = vld [vmem:[%s4 + $0x28] sm:$0xff]
    %v1701 = vld [vmem:[%s4 + $0x30] sm:$0xff]
    %v1702 = vld [vmem:[%s4 + $0x38] sm:$0xff]
    %v1703 = vld [vmem:[%s4 + $0x40] sm:$0x1]
    %v1704 = vlaneseq
    %v1705 = vshrl.u32 %v1704, 7
    %v1706 = vsub.s32 0, %v1705
    %v1707 = vrot.slane %v1703, %v1706
    %v1709 = vsel %vm370, %v1694, 0
    %1711 = vmatprep.subr.mxu0 0.0
    %1712 = vmatpush1.msra.mxu0 %v1695
    %1713 = vmatprep.subr.mxu0 0.0
    %1714 = vmatpush1.msra.mxu0 %v1696
    %1715 = vmatprep.subr.mxu0 0.0
    %1716 = vmatpush1.msra.mxu0 %v1697
    %1717 = vmatprep.subr.mxu0 0.0
    %1718 = vmatpush1.msra.mxu0 %v1698
    %1719 = vmatprep.subr.mxu0 0.0
    %1720 = vmatpush1.msra.mxu0 %v1699
    %1721 = vmatprep.subr.mxu0 0.0
    %1722 = vmatpush1.msra.mxu0 %v1700
    %1723 = vmatprep.subr.mxu0 0.0
    %1724 = vmatpush1.msra.mxu0 %v1701
    %1725 = vmatprep.subr.mxu0 0.0
    %1726 = vmatpush1.msra.mxu0 %v1702
    %1727 = vmatprep.subr.mxu0 0.0
    %1728 = vmatpush1.msra.mxu0 0.0
    %1729 = vmatprep.subr.mxu0 0.0
    %1730 = vmatpush1.msra.mxu0 0.0
    %1731 = vmatprep.subr.mxu0 0.0
    %1732 = vmatpush1.msra.mxu0 0.0
    %1733 = vmatprep.subr.mxu0 0.0
    %1734 = vmatpush1.msra.mxu0 0.0
    %1735 = vmatprep.subr.mxu0 0.0
    %1736 = vmatpush1.msra.mxu0 0.0
    %1737 = vmatprep.subr.mxu0 0.0
    %1738 = vmatpush1.msra.mxu0 0.0
    %1739 = vmatprep.subr.mxu0 0.0
    %1740 = vmatpush1.msra.mxu0 0.0
    %1741 = vmatprep.subr.mxu0 0.0
    %1742 = vmatpush1.msra.mxu0 0.0
    %1743 = vmatprep.subr.mxu0 0.0
    %1744 = vmatpush1.msra.mxu0 0.0
    %1745 = vmatprep.subr.mxu0 0.0
    %1746 = vmatpush1.msra.mxu0 0.0
    %1747 = vmatprep.subr.mxu0 0.0
    %1748 = vmatpush1.msra.mxu0 0.0
    %1749 = vmatprep.subr.mxu0 0.0
    %1750 = vmatpush1.msra.mxu0 0.0
    %1751 = vmatprep.subr.mxu0 0.0
    %1752 = vmatpush1.msra.mxu0 0.0
    %1753 = vmatprep.subr.mxu0 0.0
    %1754 = vmatpush1.msra.mxu0 0.0
    %1755 = vmatprep.subr.mxu0 0.0
    %1756 = vmatpush1.msra.mxu0 0.0
    %1757 = vmatprep.subr.mxu0 0.0
    %1758 = vmatpush1.msra.mxu0 0.0
    %1759 = vmatprep.subr.mxu0 0.0
    %1760 = vmatpush1.msra.mxu0 0.0
    %1761 = vmatprep.subr.mxu0 0.0
    %1762 = vmatpush1.msra.mxu0 0.0
    %1763 = vmatprep.subr.mxu0 0.0
    %1764 = vmatpush1.msra.mxu0 0.0
    %1765 = vmatprep.subr.mxu0 0.0
    %1766 = vmatpush1.msra.mxu0 0.0
    %1767 = vmatprep.subr.mxu0 0.0
    %1768 = vmatpush1.msra.mxu0 0.0
    %1769 = vmatprep.subr.mxu0 0.0
    %1770 = vmatpush1.msra.mxu0 0.0
    %1771 = vmatprep.subr.mxu0 0.0
    %1772 = vmatpush1.msra.mxu0 0.0
    %1773 = vmatprep.subr.mxu0 0.0
    %1774 = vmatpush1.msra.mxu0 0.0
    %1775 = vmatprep.mubr.f32.mxu0 0.0
    %1776 = vmatmul.mubr.f32.gmra.mrb[0].mxu0 %v1709
    %v1777 = vpop.f32.mrb[0].mxu0
    %v1778 = vadd.f32 %v1707, %v1777
    %v1779 = vpop.f32.mrb[0].mxu0
    %1780 = vdwg.mxu0
    %1781 = vst [vmem:[#allocation2] sm:$0x3] %v1778
    // Predicated region
    $region22: #{stable_diff_1d_forward.1} parent=1 // pred_check
      _
    $region23: #{stable_diff_1d_forward.1} parent=1 // pred_check_branch
      %1783 = sbr.rel (0) target = $region25
    $region24: #{stable_diff_1d_forward.1} parent=1 // pred_region
      %s1785 = ssub.s32 32, 32
      %1786 = vsyncadd [#allocation3], %s1785
      %s1788 = sshll.u32 [#allocation2], 4
      %s1789 = int_to_ptr.vmem [resolvable:$true] %s1788
      %1791 = dma.vmem_to_hbm [thread:$0]  %s1789, 32, %s5, [#allocation3]
    $region25: #{stable_diff_1d_forward.1} parent=1 // pred_fallthru
      _
    // Predicated region
    $region26: #{stable_diff_1d_forward.1} parent=1 // pred_check
      _
    $region27: #{stable_diff_1d_forward.1} parent=1 // pred_check_branch
      %1793 = sbr.rel (0) target = $region29
    $region28: #{stable_diff_1d_forward.1} parent=1 // pred_region
      %1794 = dma.done [#allocation3], 32
    $region29: #{stable_diff_1d_forward.1} parent=1 // pred_fallthru
      _
    %1795 = vsyncpa [#allocation3], 1

</llo_original>
